<compile_context>
chip_gen: v7x
topology: tpu7x:2x2x1
jax: 0.10.0
libtpu: 0.0.40
codegen_flags: <defaults>
</compile_context>

<pallas_src>
import functools
import re

import jax
import jax.numpy as jnp
from jax.experimental import pallas as pl
from jax.experimental.pallas import tpu as pltpu


def gdfn_kernel(x_ref, w1_ref, b1_ref, wd_ref, bd_ref, w2_ref, b2_ref, out_ref,
                *, compute_dtype):
    """Fused GDFN + residual + clamp for one (batch tile, row tile).

    x_ref   : (BT, H, W, Cin)   f32   full-height input block for this batch tile
    w1_ref  : (Cin, 2*Chid)     bf16  project_in 1x1 conv (as matmul weight)
    b1_ref  : (1, 2*Chid)       f32
    wd_ref  : (3, 3, 2*Chid)    f32   depthwise 3x3 conv weights (per-channel)
    bd_ref  : (1, 2*Chid)       f32
    w2_ref  : (Chid, Cout)      bf16  project_out 1x1 conv (as matmul weight)
    b2_ref  : (1, Cout)         f32
    out_ref : (BT, TH, W, 2*Cout) f32 [..., :Cout] = denoised, [..., Cout:] = clamp(x+den)
    """
    BT, H, W, Cin = x_ref.shape
    TH = out_ref.shape[1]
    C2 = w1_ref.shape[1]
    Chid = C2 // 2
    Cout = w2_ref.shape[1]
    cdt = compute_dtype

    hi = pl.program_id(1)
    h0 = hi * TH                                    # first output row (global H index)

    # ---- gather a (TH + 2)-row window of x: 1-row halo above/below (clamped reads) ----
    x_mid = x_ref[:, pl.ds(h0, TH)]                                    # (BT, TH, W, Cin)
    x_top = x_ref[:, pl.ds(jnp.maximum(h0 - 1, 0), 1)]
    x_bot = x_ref[:, pl.ds(jnp.minimum(h0 + TH, H - 1), 1)]
    x_win = jnp.concatenate([x_top, x_mid, x_bot], axis=1)             # (BT, TH+2, W, Cin)

    # ---- project_in: 1x1 conv == channel matmul on the MXU (bf16 in, f32 acc) ----
    y = jnp.dot(x_win.reshape(BT * (TH + 2) * W, Cin).astype(jnp.bfloat16), w1_ref[...],
                preferred_element_type=jnp.float32) + b1_ref[...]
    y = y.reshape(BT, TH + 2, W, C2)

    # zero the halo rows that fall outside the image (dconv zero padding applies to y)
    row = jax.lax.broadcasted_iota(jnp.int32, (1, TH + 2, W, 1), 1)
    top_ok = (h0 > 0).astype(jnp.float32)
    bot_ok = (h0 + TH < H).astype(jnp.float32)
    hmask = jnp.where(row == 0, top_ok, jnp.where(row == TH + 1, bot_ok, 1.0))
    y = y * hmask

    # ---- depthwise 3x3 taps, fully in registers ----
    # W taps: XLU rolls + small (1,1,W,1) edge masks (zero padding).
    col = jax.lax.broadcasted_iota(jnp.int32, (1, 1, W, 1), 2)
    lmask = (col > 0).astype(jnp.float32)
    rmask = (col < W - 1).astype(jnp.float32)
    # TODO(synk): move the rolls after the cdt cast once bf16 sublane rotates are verified.
    y_m1 = (pltpu.roll(y, shift=1, axis=2) * lmask).astype(cdt)        # y[., w-1, .]
    y_p1 = (pltpu.roll(y, shift=W - 1, axis=2) * rmask).astype(cdt)    # y[., w+1, .]
    y = y.astype(cdt)

    wd = wd_ref[...].astype(cdt)                    # (3, 3, C2), loaded/cast once
    bd = bd_ref[...].astype(cdt)                    # (1, C2)

    # H taps come for free from the halo window: output row r uses window rows r, r+1, r+2.
    acc = None
    for k in range(3):
        term = (y_m1[:, k:k + TH] * wd[k, 0]
                + y[:, k:k + TH] * wd[k, 1]
                + y_p1[:, k:k + TH] * wd[k, 2])
        acc = term if acc is None else acc + term
    acc = acc + bd

    # ---- gated activation: gelu(x1) * x2 ----
    # TODO(synk): torch F.gelu default is exact erf GELU; tanh approximation used here.
    g = jax.nn.gelu(acc[..., :Chid], approximate=True) * acc[..., Chid:]

    # ---- project_out: 1x1 conv == channel matmul on the MXU (bf16 in, f32 acc) ----
    den = jnp.dot(g.reshape(BT * TH * W, Chid).astype(jnp.bfloat16), w2_ref[...],
                  preferred_element_type=jnp.float32) + b2_ref[...]
    den = den.reshape(BT, TH, W, Cout)

    add = jnp.clip(x_mid + den, 0.0, 255.0)
    # single lane-dense (Cout + Cout = 128) store / output DMA
    # TODO(synk): emit this slab as bf16 if downstream tolerates it (halves output HBM bytes).
    out_ref[...] = jnp.concatenate([den, add], axis=-1).astype(out_ref.dtype)


def _tpu_generation():
    try:
        kind = jax.devices()[0].device_kind
    except Exception:
        return None
    m = re.search(r"(\d+)", kind)
    return int(m.group(1)) if m else None


def _vmem_capacity_bytes(gen):
    try:
        cap = getattr(pltpu.get_tpu_info(), "vmem_capacity_bytes", None)
        if cap:
            return int(cap)
    except Exception:
        pass
    if gen is not None and gen >= 7:
        return 64 * 1024 * 1024           # v7x
    return 128 * 1024 * 1024              # v5e / v6e


def _pick_tiles(B, H, W, cin, c2, cout, esize, budget, min_steps=2, target_steps=4):
    """Pick (batch_tile, h_tile) divisors of (B, H) whose per-step working set fits
    `budget`, preferring >= min_steps grid steps (DMA/compute overlap, dual-TC sharding)."""
    chid = c2 // 2

    def est(bt, th):
        win, body = bt * (th + 2) * W, bt * th * W
        io = 2 * 4 * bt * H * W * cin + 2 * 4 * bt * th * W * (2 * cout)  # dbl-buffered blocks
        temps = win * c2 * (3 * 4 + 3 * esize)                # y / y_m1 / y_p1 (f32 + cdt)
        temps += body * (c2 + chid) * esize                   # acc + gate
        temps += body * 4 * (cin + 4 * cout)                  # x_mid, den, add, packed out
        wgts = 4 * (cin * c2 + chid * cout) + 8 * (9 * c2 + 2 * c2 + cout)
        return io + temps + wgts + (1 << 20)

    bdivs = [d for d in range(1, B + 1) if B % d == 0]
    hdivs = [d for d in range(1, H + 1) if H % d == 0]
    fitting = [(bt, th) for bt in bdivs for th in hdivs if est(bt, th) <= budget]
    if not fitting:
        # TODO(synk): for extreme H*W the full-H x block itself overflows VMEM; row-tile the
        # x fetch too via a manual halo DMA (memory_space=pl.ANY) instead of a BlockSpec.
        return 1, 1, est(1, 1)

    def score(c):
        bt, th = c
        steps = (B // bt) * (H // th)
        # prefer >= min_steps, then up to target_steps, then big tiles, then batch-axis steps
        return (steps >= min_steps, min(steps, target_steps), bt * th, B // bt)

    bt, th = max(fitting, key=score)
    return bt, th, est(bt, th)


def gdfn_residual_clamp(x_nhwc, params):
    """Runs the fused GDFN kernel. Returns (denoised, clamp(x + denoised, 0, 255))."""
    w1, b1, wd, bd, w2, b2 = params
    B, H, W, Cin = x_nhwc.shape
    C2 = w1.shape[1]
    Chid = C2 // 2
    Cout = w2.shape[1]
    assert Cin == Cout, "residual add requires Cin == Cout"

    gen = _tpu_generation()
    # bf16 dconv/gating only where the VPU/EUP have bf16 datapaths (v6e / v7x).
    compute_dtype = jnp.bfloat16 if (gen is not None and gen >= 6) else jnp.float32

    capacity = _vmem_capacity_bytes(gen)
    usable = capacity * 3 // 4                       # ~25% headroom (≈48 MiB cap on v7x)
    bt, th, est = _pick_tiles(B, H, W, Cin, C2, Cout,
                              esize=jnp.dtype(compute_dtype).itemsize, budget=usable)
    grid = (B // bt, H // th)
    vmem_limit = int(min(max(3 * est // 2 + (2 << 20), 16 << 20), usable))

    w1b = w1.astype(jnp.bfloat16)
    w2b = w2.astype(jnp.bfloat16)

    grid_spec = pltpu.PrefetchScalarGridSpec(
        num_scalar_prefetch=0,
        grid=grid,
        in_specs=[
            pl.BlockSpec((bt, H, W, Cin), lambda b, h: (b, 0, 0, 0)),   # full-H x block
            pl.BlockSpec((Cin, C2), lambda b, h: (0, 0)),
            pl.BlockSpec((1, C2), lambda b, h: (0, 0)),
            pl.BlockSpec((3, 3, C2), lambda b, h: (0, 0, 0)),
            pl.BlockSpec((1, C2), lambda b, h: (0, 0)),
            pl.BlockSpec((Chid, Cout), lambda b, h: (0, 0)),
            pl.BlockSpec((1, Cout), lambda b, h: (0, 0)),
        ],
        out_specs=pl.BlockSpec((bt, th, W, 2 * Cout), lambda b, h: (b, h, 0, 0)),
    )
    out = pl.pallas_call(
        functools.partial(gdfn_kernel, compute_dtype=compute_dtype),
        out_shape=jax.ShapeDtypeStruct((B, H, W, 2 * Cout), jnp.float32),
        grid_spec=grid_spec,
        compiler_params=pltpu.CompilerParams(
            dimension_semantics=("parallel", "parallel"),
            vmem_limit_bytes=vmem_limit,
        ),
    )(x_nhwc, w1b, b1, wd, bd, w2b, b2)

    return out[..., :Cout], out[..., Cout:]


@jax.jit
def model_forward(x_nchw, points, params):
    """Mirrors Model.forward. Returns (denoised_img, img_add)."""
    # TODO(synk): if the surrounding model can consume NHWC, drop these transposes
    # (each is a full extra HBM read+write outside the kernel).
    x_nhwc = jnp.transpose(x_nchw, (0, 2, 3, 1)).astype(jnp.float32)
    den_nhwc, add_nhwc = gdfn_residual_clamp(x_nhwc, params)
    denoised_img = jnp.transpose(den_nhwc, (0, 3, 1, 2))
    img_add = jnp.transpose(add_nhwc, (0, 3, 1, 2))
    # TODO(synk): SAM (image_encoder / prompt_encoder / mask_decoder) requires a
    # pretrained ViT checkpoint and full SAM architecture; masks are not produced.
    del points
    return denoised_img, img_add


def init_params(key, cin=64, chid=128, cout=64):
    c2 = 2 * chid
    k1, k2, k3, k4, k5, k6 = jax.random.split(key, 6)
    w1 = jax.random.normal(k1, (cin, c2), jnp.float32) / jnp.sqrt(cin)
    b1 = jax.random.normal(k2, (1, c2), jnp.float32) * 0.01
    wd = jax.random.normal(k3, (3, 3, c2), jnp.float32) * 0.1
    bd = jax.random.normal(k4, (1, c2), jnp.float32) * 0.01
    w2 = jax.random.normal(k5, (chid, cout), jnp.float32) / jnp.sqrt(chid)
    b2 = jax.random.normal(k6, (1, cout), jnp.float32) * 0.01
    return (w1, b1, wd, bd, w2, b2)


def gdfn_reference(x_nhwc, params, compute_dtype):
    """Pure-JAX reference using the same math / dtypes / accumulation order as the kernel."""
    w1, b1, wd, bd, w2, b2 = params
    B, H, W, Cin = x_nhwc.shape
    C2 = w1.shape[1]
    Chid = C2 // 2
    cdt = compute_dtype
    y = jnp.dot(x_nhwc.reshape(-1, Cin).astype(jnp.bfloat16), w1.astype(jnp.bfloat16),
                preferred_element_type=jnp.float32) + b1
    y = y.reshape(B, H, W, C2).astype(cdt)
    zcol = jnp.zeros((B, H, 1, C2), cdt)
    y_m1 = jnp.concatenate([zcol, y[:, :, :W - 1]], axis=2)
    y_p1 = jnp.concatenate([y[:, :, 1:], zcol], axis=2)
    zrow = jnp.zeros((B, 1, W, C2), cdt)

    def hshift(t, k):   # rows h + (k - 1), zero padded at the image borders
        if k == 0:
            return jnp.concatenate([zrow, t[:, :H - 1]], axis=1)
        if k == 1:
            return t
        return jnp.concatenate([t[:, 1:], zrow], axis=1)

    wd_c = wd.astype(cdt)
    bd_c = bd.astype(cdt)
    acc = None
    for k in range(3):
        term = (hshift(y_m1, k) * wd_c[k, 0]
                + hshift(y, k) * wd_c[k, 1]
                + hshift(y_p1, k) * wd_c[k, 2])
        acc = term if acc is None else acc + term
    acc = acc + bd_c
    g = jax.nn.gelu(acc[..., :Chid], approximate=True) * acc[..., Chid:]
    den = jnp.dot(g.reshape(-1, Chid).astype(jnp.bfloat16), w2.astype(jnp.bfloat16),
                  preferred_element_type=jnp.float32) + b2
    den = den.reshape(B, H, W, -1)
    add = jnp.clip(x_nhwc + den, 0.0, 255.0)
    return den, add


if __name__ == "__main__":
    key = jax.random.PRNGKey(0)
    kp, kx, kpts = jax.random.split(key, 3)

    B, C, HH, WW = 2, 64, 16, 16            # GDFN requires 64 input channels
    params = init_params(kp, cin=64, chid=128, cout=64)
    x = jax.random.uniform(kx, (B, C, HH, WW), jnp.float32) * 255.0   # NCHW input
    points = jax.random.uniform(kpts, (B, 1, 2), jnp.float32) * HH    # unused (SAM)

    denoised, img_add = model_forward(x, points, params)
    jax.block_until_ready((denoised, img_add))

    # correctness check against a pure-JAX reference using the same compute dtypes
    gen = _tpu_generation()
    cdt = jnp.bfloat16 if (gen is not None and gen >= 6) else jnp.float32
    x_nhwc = jnp.transpose(x, (0, 2, 3, 1))
    den_ref, add_ref = gdfn_reference(x_nhwc, params, cdt)
    den_ref = jnp.transpose(den_ref, (0, 3, 1, 2))
    add_ref = jnp.transpose(add_ref, (0, 3, 1, 2))
    assert jnp.allclose(denoised, den_ref, rtol=2e-3, atol=2.0), "denoised mismatch"
    assert jnp.allclose(img_add, add_ref, rtol=2e-3, atol=2.0), "img_add mismatch"

    print("KERNEL_OK")
</pallas_src>

<mosaic_0001>
module attributes {stable_mosaic.version = 11 : i64} {
  func.func @gdfn_kernel(%arg0: i32, %arg1: i32, %arg2: memref<1x16x16x64xf32, #tpu.memory_space<vmem>>, %arg3: memref<64x256xbf16, #tpu.memory_space<vmem>>, %arg4: memref<1x256xf32, #tpu.memory_space<vmem>>, %arg5: memref<3x3x256xf32, #tpu.memory_space<vmem>>, %arg6: memref<1x256xf32, #tpu.memory_space<vmem>>, %arg7: memref<128x64xbf16, #tpu.memory_space<vmem>>, %arg8: memref<1x64xf32, #tpu.memory_space<vmem>>, %arg9: memref<1x8x16x128xf32, #tpu.memory_space<vmem>>) attributes {dimension_semantics = [#tpu.dimension_semantics<parallel>, #tpu.dimension_semantics<parallel>], iteration_bounds = array<i64: 2, 2>, scalar_prefetch = 0 : i64, scratch_operands = 0 : i64, tpu.core_type = #tpu.core_type<tc>, window_params = [{transform_indices = @transform_0, window_bounds = array<i64: 1, 16, 16, 64>}, {pipeline_mode = #tpu.pipeline_mode<synchronous>, transform_indices = @transform_1, window_bounds = array<i64: 64, 256>}, {pipeline_mode = #tpu.pipeline_mode<synchronous>, transform_indices = @transform_2, window_bounds = array<i64: 1, 256>}, {pipeline_mode = #tpu.pipeline_mode<synchronous>, transform_indices = @transform_3, window_bounds = array<i64: 3, 3, 256>}, {pipeline_mode = #tpu.pipeline_mode<synchronous>, transform_indices = @transform_4, window_bounds = array<i64: 1, 256>}, {pipeline_mode = #tpu.pipeline_mode<synchronous>, transform_indices = @transform_5, window_bounds = array<i64: 128, 64>}, {pipeline_mode = #tpu.pipeline_mode<synchronous>, transform_indices = @transform_6, window_bounds = array<i64: 1, 64>}, {transform_indices = @transform_7, window_bounds = array<i64: 1, 8, 16, 128>}]} {
    %c8_i32 = arith.constant 8 : i32
    %0 = arith.muli %arg1, %c8_i32 : i32
    %c0 = arith.constant 0 : index
    %1 = arith.index_cast %0 : i32 to index
    %c0_0 = arith.constant 0 : index
    %c0_1 = arith.constant 0 : index
    %2 = vector.load %arg2[%c0, %1, %c0_0, %c0_1] : memref<1x16x16x64xf32, #tpu.memory_space<vmem>>, vector<1x8x16x64xf32>
    %c1_i32 = arith.constant 1 : i32
    %3 = arith.subi %0, %c1_i32 : i32
    %c0_i32 = arith.constant 0 : i32
    %4 = arith.maxsi %3, %c0_i32 : i32
    %c0_2 = arith.constant 0 : index
    %5 = arith.index_cast %4 : i32 to index
    %c0_3 = arith.constant 0 : index
    %c0_4 = arith.constant 0 : index
    %6 = vector.load %arg2[%c0_2, %5, %c0_3, %c0_4] : memref<1x16x16x64xf32, #tpu.memory_space<vmem>>, vector<1x1x16x64xf32>
    %c8_i32_5 = arith.constant 8 : i32
    %7 = arith.addi %0, %c8_i32_5 : i32
    %c15_i32 = arith.constant 15 : i32
    %8 = arith.minsi %7, %c15_i32 : i32
    %c0_6 = arith.constant 0 : index
    %9 = arith.index_cast %8 : i32 to index
    %c0_7 = arith.constant 0 : index
    %c0_8 = arith.constant 0 : index
    %10 = vector.load %arg2[%c0_6, %9, %c0_7, %c0_8] : memref<1x16x16x64xf32, #tpu.memory_space<vmem>>, vector<1x1x16x64xf32>
    %11 = tpu.concatenate %6, %2, %10 in 1 : vector<1x1x16x64xf32>, vector<1x8x16x64xf32>, vector<1x1x16x64xf32> -> vector<1x10x16x64xf32>
    %12 = vector.shape_cast %11 : vector<1x10x16x64xf32> to vector<160x64xf32>
    %13 = arith.truncf %12 : vector<160x64xf32> to vector<160x64xbf16>
    %c0_9 = arith.constant 0 : index
    %c0_10 = arith.constant 0 : index
    %14 = vector.load %arg3[%c0_9, %c0_10] : memref<64x256xbf16, #tpu.memory_space<vmem>>, vector<64x256xbf16>
    %cst = arith.constant dense<0.000000e+00> : vector<160x256xf32>
    %15 = tpu.matmul %13, %14, %cst {dimension_numbers = #tpu.dot_dimension_numbers<[1], [0], [0], [1], [0, 0, 1, 1], [], []>} : vector<160x64xbf16>, vector<64x256xbf16>, vector<160x256xf32> -> vector<160x256xf32>
    %c0_11 = arith.constant 0 : index
    %c0_12 = arith.constant 0 : index
    %16 = vector.load %arg4[%c0_11, %c0_12] : memref<1x256xf32, #tpu.memory_space<vmem>>, vector<1x256xf32>
    %17 = vector.broadcast %16 : vector<1x256xf32> to vector<160x256xf32>
    %18 = arith.addf %15, %17 : vector<160x256xf32>
    %19 = vector.shape_cast %18 : vector<160x256xf32> to vector<1x10x16x256xf32>
    %20 = tpu.iota {dimensions = array<i32: 1>} : vector<1x10x16x1xi32>
    %c0_i32_13 = arith.constant 0 : i32
    %21 = arith.cmpi sgt, %0, %c0_i32_13 : i32
    %22 = arith.extui %21 : i1 to i32
    %23 = arith.sitofp %22 : i32 to f32
    %c8_i32_14 = arith.constant 8 : i32
    %24 = arith.addi %0, %c8_i32_14 : i32
    %c16_i32 = arith.constant 16 : i32
    %25 = arith.cmpi slt, %24, %c16_i32 : i32
    %26 = arith.extui %25 : i1 to i32
    %27 = arith.sitofp %26 : i32 to f32
    %c0_i32_15 = arith.constant 0 : i32
    %28 = vector.broadcast %c0_i32_15 : i32 to vector<1x10x16x1xi32>
    %29 = arith.cmpi eq, %20, %28 : vector<1x10x16x1xi32>
    %c9_i32 = arith.constant 9 : i32
    %30 = vector.broadcast %c9_i32 : i32 to vector<1x10x16x1xi32>
    %31 = arith.cmpi eq, %20, %30 : vector<1x10x16x1xi32>
    %cst_16 = arith.constant 1.000000e+00 : f32
    %32 = vector.broadcast %27 : f32 to vector<1x10x16x1xf32>
    %33 = vector.broadcast %cst_16 : f32 to vector<1x10x16x1xf32>
    %34 = arith.select %31, %32, %33 : vector<1x10x16x1xi1>, vector<1x10x16x1xf32>
    %35 = vector.broadcast %23 : f32 to vector<1x10x16x1xf32>
    %36 = arith.select %29, %35, %34 : vector<1x10x16x1xi1>, vector<1x10x16x1xf32>
    %37 = vector.broadcast %36 : vector<1x10x16x1xf32> to vector<1x10x16x256xf32>
    %38 = arith.mulf %19, %37 : vector<1x10x16x256xf32>
    %39 = tpu.iota {dimensions = array<i32: 2>} : vector<1x1x16x1xi32>
    %c0_i32_17 = arith.constant 0 : i32
    %40 = vector.broadcast %c0_i32_17 : i32 to vector<1x1x16x1xi32>
    %41 = arith.cmpi sgt, %39, %40 : vector<1x1x16x1xi32>
    %42 = arith.extui %41 : vector<1x1x16x1xi1> to vector<1x1x16x1xi32>
    %43 = arith.sitofp %42 : vector<1x1x16x1xi32> to vector<1x1x16x1xf32>
    %c15_i32_18 = arith.constant 15 : i32
    %44 = vector.broadcast %c15_i32_18 : i32 to vector<1x1x16x1xi32>
    %45 = arith.cmpi slt, %39, %44 : vector<1x1x16x1xi32>
    %46 = arith.extui %45 : vector<1x1x16x1xi1> to vector<1x1x16x1xi32>
    %47 = arith.sitofp %46 : vector<1x1x16x1xi32> to vector<1x1x16x1xf32>
    %c1_i32_19 = arith.constant 1 : i32
    %48 = tpu.dynamic_rotate %38 by %c1_i32_19 dim 2 : vector<1x10x16x256xf32>, i32 -> vector<1x10x16x256xf32>
    %49 = vector.broadcast %43 : vector<1x1x16x1xf32> to vector<1x10x16x256xf32>
    %50 = arith.mulf %48, %49 : vector<1x10x16x256xf32>
    %c15_i32_20 = arith.constant 15 : i32
    %51 = tpu.dynamic_rotate %38 by %c15_i32_20 dim 2 : vector<1x10x16x256xf32>, i32 -> vector<1x10x16x256xf32>
    %52 = vector.broadcast %47 : vector<1x1x16x1xf32> to vector<1x10x16x256xf32>
    %53 = arith.mulf %51, %52 : vector<1x10x16x256xf32>
    %c0_21 = arith.constant 0 : index
    %c0_22 = arith.constant 0 : index
    %c0_23 = arith.constant 0 : index
    %54 = vector.load %arg5[%c0_21, %c0_22, %c0_23] : memref<3x3x256xf32, #tpu.memory_space<vmem>>, vector<3x3x256xf32>
    %c0_24 = arith.constant 0 : index
    %c0_25 = arith.constant 0 : index
    %55 = vector.load %arg6[%c0_24, %c0_25] : memref<1x256xf32, #tpu.memory_space<vmem>>, vector<1x256xf32>
    %56 = vector.extract_strided_slice %50 {offsets = [0, 0, 0, 0], sizes = [1, 8, 16, 256], strides = [1, 1, 1, 1]} : vector<1x10x16x256xf32> to vector<1x8x16x256xf32>
    %57 = vector.extract_strided_slice %54 {offsets = [0, 0, 0], sizes = [1, 1, 256], strides = [1, 1, 1]} : vector<3x3x256xf32> to vector<1x1x256xf32>
    %58 = vector.shape_cast %57 : vector<1x1x256xf32> to vector<256xf32>
    %59 = vector.shape_cast %58 : vector<256xf32> to vector<1x1x1x256xf32>
    %60 = vector.broadcast %59 : vector<1x1x1x256xf32> to vector<1x8x16x256xf32>
    %61 = arith.mulf %56, %60 : vector<1x8x16x256xf32>
    %62 = vector.extract_strided_slice %38 {offsets = [0, 0, 0, 0], sizes = [1, 8, 16, 256], strides = [1, 1, 1, 1]} : vector<1x10x16x256xf32> to vector<1x8x16x256xf32>
    %63 = vector.extract_strided_slice %54 {offsets = [0, 1, 0], sizes = [1, 1, 256], strides = [1, 1, 1]} : vector<3x3x256xf32> to vector<1x1x256xf32>
    %64 = vector.shape_cast %63 : vector<1x1x256xf32> to vector<256xf32>
    %65 = vector.shape_cast %64 : vector<256xf32> to vector<1x1x1x256xf32>
    %66 = vector.broadcast %65 : vector<1x1x1x256xf32> to vector<1x8x16x256xf32>
    %67 = arith.mulf %62, %66 : vector<1x8x16x256xf32>
    %68 = arith.addf %61, %67 : vector<1x8x16x256xf32>
    %69 = vector.extract_strided_slice %53 {offsets = [0, 0, 0, 0], sizes = [1, 8, 16, 256], strides = [1, 1, 1, 1]} : vector<1x10x16x256xf32> to vector<1x8x16x256xf32>
    %70 = vector.extract_strided_slice %54 {offsets = [0, 2, 0], sizes = [1, 1, 256], strides = [1, 1, 1]} : vector<3x3x256xf32> to vector<1x1x256xf32>
    %71 = vector.shape_cast %70 : vector<1x1x256xf32> to vector<256xf32>
    %72 = vector.shape_cast %71 : vector<256xf32> to vector<1x1x1x256xf32>
    %73 = vector.broadcast %72 : vector<1x1x1x256xf32> to vector<1x8x16x256xf32>
    %74 = arith.mulf %69, %73 : vector<1x8x16x256xf32>
    %75 = arith.addf %68, %74 : vector<1x8x16x256xf32>
    %76 = vector.extract_strided_slice %50 {offsets = [0, 1, 0, 0], sizes = [1, 8, 16, 256], strides = [1, 1, 1, 1]} : vector<1x10x16x256xf32> to vector<1x8x16x256xf32>
    %77 = vector.extract_strided_slice %54 {offsets = [1, 0, 0], sizes = [1, 1, 256], strides = [1, 1, 1]} : vector<3x3x256xf32> to vector<1x1x256xf32>
    %78 = vector.shape_cast %77 : vector<1x1x256xf32> to vector<256xf32>
    %79 = vector.shape_cast %78 : vector<256xf32> to vector<1x1x1x256xf32>
    %80 = vector.broadcast %79 : vector<1x1x1x256xf32> to vector<1x8x16x256xf32>
    %81 = arith.mulf %76, %80 : vector<1x8x16x256xf32>
    %82 = vector.extract_strided_slice %38 {offsets = [0, 1, 0, 0], sizes = [1, 8, 16, 256], strides = [1, 1, 1, 1]} : vector<1x10x16x256xf32> to vector<1x8x16x256xf32>
    %83 = vector.extract_strided_slice %54 {offsets = [1, 1, 0], sizes = [1, 1, 256], strides = [1, 1, 1]} : vector<3x3x256xf32> to vector<1x1x256xf32>
    %84 = vector.shape_cast %83 : vector<1x1x256xf32> to vector<256xf32>
    %85 = vector.shape_cast %84 : vector<256xf32> to vector<1x1x1x256xf32>
    %86 = vector.broadcast %85 : vector<1x1x1x256xf32> to vector<1x8x16x256xf32>
    %87 = arith.mulf %82, %86 : vector<1x8x16x256xf32>
    %88 = arith.addf %81, %87 : vector<1x8x16x256xf32>
    %89 = vector.extract_strided_slice %53 {offsets = [0, 1, 0, 0], sizes = [1, 8, 16, 256], strides = [1, 1, 1, 1]} : vector<1x10x16x256xf32> to vector<1x8x16x256xf32>
    %90 = vector.extract_strided_slice %54 {offsets = [1, 2, 0], sizes = [1, 1, 256], strides = [1, 1, 1]} : vector<3x3x256xf32> to vector<1x1x256xf32>
    %91 = vector.shape_cast %90 : vector<1x1x256xf32> to vector<256xf32>
    %92 = vector.shape_cast %91 : vector<256xf32> to vector<1x1x1x256xf32>
    %93 = vector.broadcast %92 : vector<1x1x1x256xf32> to vector<1x8x16x256xf32>
    %94 = arith.mulf %89, %93 : vector<1x8x16x256xf32>
    %95 = arith.addf %88, %94 : vector<1x8x16x256xf32>
    %96 = arith.addf %75, %95 : vector<1x8x16x256xf32>
    %97 = vector.extract_strided_slice %50 {offsets = [0, 2, 0, 0], sizes = [1, 8, 16, 256], strides = [1, 1, 1, 1]} : vector<1x10x16x256xf32> to vector<1x8x16x256xf32>
    %98 = vector.extract_strided_slice %54 {offsets = [2, 0, 0], sizes = [1, 1, 256], strides = [1, 1, 1]} : vector<3x3x256xf32> to vector<1x1x256xf32>
    %99 = vector.shape_cast %98 : vector<1x1x256xf32> to vector<256xf32>
    %100 = vector.shape_cast %99 : vector<256xf32> to vector<1x1x1x256xf32>
    %101 = vector.broadcast %100 : vector<1x1x1x256xf32> to vector<1x8x16x256xf32>
    %102 = arith.mulf %97, %101 : vector<1x8x16x256xf32>
    %103 = vector.extract_strided_slice %38 {offsets = [0, 2, 0, 0], sizes = [1, 8, 16, 256], strides = [1, 1, 1, 1]} : vector<1x10x16x256xf32> to vector<1x8x16x256xf32>
    %104 = vector.extract_strided_slice %54 {offsets = [2, 1, 0], sizes = [1, 1, 256], strides = [1, 1, 1]} : vector<3x3x256xf32> to vector<1x1x256xf32>
    %105 = vector.shape_cast %104 : vector<1x1x256xf32> to vector<256xf32>
    %106 = vector.shape_cast %105 : vector<256xf32> to vector<1x1x1x256xf32>
    %107 = vector.broadcast %106 : vector<1x1x1x256xf32> to vector<1x8x16x256xf32>
    %108 = arith.mulf %103, %107 : vector<1x8x16x256xf32>
    %109 = arith.addf %102, %108 : vector<1x8x16x256xf32>
    %110 = vector.extract_strided_slice %53 {offsets = [0, 2, 0, 0], sizes = [1, 8, 16, 256], strides = [1, 1, 1, 1]} : vector<1x10x16x256xf32> to vector<1x8x16x256xf32>
    %111 = vector.extract_strided_slice %54 {offsets = [2, 2, 0], sizes = [1, 1, 256], strides = [1, 1, 1]} : vector<3x3x256xf32> to vector<1x1x256xf32>
    %112 = vector.shape_cast %111 : vector<1x1x256xf32> to vector<256xf32>
    %113 = vector.shape_cast %112 : vector<256xf32> to vector<1x1x1x256xf32>
    %114 = vector.broadcast %113 : vector<1x1x1x256xf32> to vector<1x8x16x256xf32>
    %115 = arith.mulf %110, %114 : vector<1x8x16x256xf32>
    %116 = arith.addf %109, %115 : vector<1x8x16x256xf32>
    %117 = arith.addf %96, %116 : vector<1x8x16x256xf32>
    %118 = vector.shape_cast %55 : vector<1x256xf32> to vector<1x1x1x256xf32>
    %119 = vector.broadcast %118 : vector<1x1x1x256xf32> to vector<1x8x16x256xf32>
    %120 = arith.addf %117, %119 : vector<1x8x16x256xf32>
    %121 = vector.extract_strided_slice %120 {offsets = [0, 0, 0, 0], sizes = [1, 8, 16, 128], strides = [1, 1, 1, 1]} : vector<1x8x16x256xf32> to vector<1x8x16x128xf32>
    %122 = arith.mulf %121, %121 : vector<1x8x16x128xf32>
    %123 = arith.mulf %121, %122 : vector<1x8x16x128xf32>
    %cst_26 = arith.constant 4.471500e-02 : f32
    %124 = vector.broadcast %cst_26 : f32 to vector<1x8x16x128xf32>
    %125 = arith.mulf %124, %123 : vector<1x8x16x128xf32>
    %126 = arith.addf %121, %125 : vector<1x8x16x128xf32>
    %cst_27 = arith.constant 0.797884583 : f32
    %127 = vector.broadcast %cst_27 : f32 to vector<1x8x16x128xf32>
    %128 = arith.mulf %127, %126 : vector<1x8x16x128xf32>
    %129 = math.tanh %128 : vector<1x8x16x128xf32>
    %cst_28 = arith.constant 1.000000e+00 : f32
    %130 = vector.broadcast %cst_28 : f32 to vector<1x8x16x128xf32>
    %131 = arith.addf %130, %129 : vector<1x8x16x128xf32>
    %cst_29 = arith.constant 5.000000e-01 : f32
    %132 = vector.broadcast %cst_29 : f32 to vector<1x8x16x128xf32>
    %133 = arith.mulf %132, %131 : vector<1x8x16x128xf32>
    %134 = arith.mulf %121, %133 : vector<1x8x16x128xf32>
    %135 = vector.extract_strided_slice %120 {offsets = [0, 0, 0, 128], sizes = [1, 8, 16, 128], strides = [1, 1, 1, 1]} : vector<1x8x16x256xf32> to vector<1x8x16x128xf32>
    %136 = arith.mulf %134, %135 : vector<1x8x16x128xf32>
    %137 = vector.shape_cast %136 : vector<1x8x16x128xf32> to vector<128x128xf32>
    %138 = arith.truncf %137 : vector<128x128xf32> to vector<128x128xbf16>
    %c0_30 = arith.constant 0 : index
    %c0_31 = arith.constant 0 : index
    %139 = vector.load %arg7[%c0_30, %c0_31] : memref<128x64xbf16, #tpu.memory_space<vmem>>, vector<128x64xbf16>
    %cst_32 = arith.constant dense<0.000000e+00> : vector<128x64xf32>
    %140 = tpu.matmul %138, %139, %cst_32 {dimension_numbers = #tpu.dot_dimension_numbers<[1], [0], [0], [1], [0, 0, 1, 1], [], []>} : vector<128x128xbf16>, vector<128x64xbf16>, vector<128x64xf32> -> vector<128x64xf32>
    %c0_33 = arith.constant 0 : index
    %c0_34 = arith.constant 0 : index
    %141 = vector.load %arg8[%c0_33, %c0_34] : memref<1x64xf32, #tpu.memory_space<vmem>>, vector<1x64xf32>
    %142 = vector.broadcast %141 : vector<1x64xf32> to vector<128x64xf32>
    %143 = arith.addf %140, %142 : vector<128x64xf32>
    %144 = vector.shape_cast %143 : vector<128x64xf32> to vector<1x8x16x64xf32>
    %145 = arith.addf %2, %144 : vector<1x8x16x64xf32>
    %cst_35 = arith.constant 0.000000e+00 : f32
    %cst_36 = arith.constant 2.550000e+02 : f32
    %146 = vector.broadcast %cst_35 : f32 to vector<1x8x16x64xf32>
    %147 = arith.maximumf %146, %145 : vector<1x8x16x64xf32>
    %148 = vector.broadcast %cst_36 : f32 to vector<1x8x16x64xf32>
    %149 = arith.minimumf %148, %147 : vector<1x8x16x64xf32>
    %150 = tpu.concatenate %144, %149 in 3 : vector<1x8x16x64xf32>, vector<1x8x16x64xf32> -> vector<1x8x16x128xf32>
    %c0_37 = arith.constant 0 : index
    %c0_38 = arith.constant 0 : index
    %c0_39 = arith.constant 0 : index
    %c0_40 = arith.constant 0 : index
    %151 = vector.load %arg9[%c0_37, %c0_38, %c0_39, %c0_40] : memref<1x8x16x128xf32, #tpu.memory_space<vmem>>, vector<1x8x16x128xf32>
    tpu.vector_store %arg9[%c0_37, %c0_38, %c0_39, %c0_40], %150 {strides = array<i32>} : memref<1x8x16x128xf32, #tpu.memory_space<vmem>>, vector<1x8x16x128xf32>,
    return
  }
  func.func @transform_0(%arg0: i32, %arg1: i32) -> (i32, i32, i32, i32) {
    %c0_i32 = arith.constant 0 : i32
    %c0_i32_0 = arith.constant 0 : i32
    %c0_i32_1 = arith.constant 0 : i32
    %c0_i32_2 = arith.constant 0 : i32
    return %arg0, %c0_i32, %c0_i32_0, %c0_i32_1 : i32, i32, i32, i32
  }
  func.func @transform_1(%arg0: i32, %arg1: i32) -> (i32, i32) {
    %c0_i32 = arith.constant 0 : i32
    %c0_i32_0 = arith.constant 0 : i32
    %c0_i32_1 = arith.constant 0 : i32
    return %c0_i32, %c0_i32_0 : i32, i32
  }
  func.func @transform_2(%arg0: i32, %arg1: i32) -> (i32, i32) {
    %c0_i32 = arith.constant 0 : i32
    %c0_i32_0 = arith.constant 0 : i32
    %c0_i32_1 = arith.constant 0 : i32
    return %c0_i32, %c0_i32_0 : i32, i32
  }
  func.func @transform_3(%arg0: i32, %arg1: i32) -> (i32, i32, i32) {
    %c0_i32 = arith.constant 0 : i32
    %c0_i32_0 = arith.constant 0 : i32
    %c0_i32_1 = arith.constant 0 : i32
    %c0_i32_2 = arith.constant 0 : i32
    return %c0_i32, %c0_i32_0, %c0_i32_1 : i32, i32, i32
  }
  func.func @transform_4(%arg0: i32, %arg1: i32) -> (i32, i32) {
    %c0_i32 = arith.constant 0 : i32
    %c0_i32_0 = arith.constant 0 : i32
    %c0_i32_1 = arith.constant 0 : i32
    return %c0_i32, %c0_i32_0 : i32, i32
  }
  func.func @transform_5(%arg0: i32, %arg1: i32) -> (i32, i32) {
    %c0_i32 = arith.constant 0 : i32
    %c0_i32_0 = arith.constant 0 : i32
    %c0_i32_1 = arith.constant 0 : i32
    return %c0_i32, %c0_i32_0 : i32, i32
  }
  func.func @transform_6(%arg0: i32, %arg1: i32) -> (i32, i32) {
    %c0_i32 = arith.constant 0 : i32
    %c0_i32_0 = arith.constant 0 : i32
    %c0_i32_1 = arith.constant 0 : i32
    return %c0_i32, %c0_i32_0 : i32, i32
  }
  func.func @transform_7(%arg0: i32, %arg1: i32) -> (i32, i32, i32, i32) {
    %c0_i32 = arith.constant 0 : i32
    %c0_i32_0 = arith.constant 0 : i32
    %c0_i32_1 = arith.constant 0 : i32
    return %arg0, %arg1, %c0_i32, %c0_i32_0 : i32, i32, i32, i32
  }
}

</mosaic_0001>

<llo_original>
// kernel: model_forward.1
$region0: #{model_forward.1}
  #allocation0 [shape = 'u32[]', space=smem, size = 0x4, offset = 0x4, fixed_abs, tag = 'smem constant byte address 0x4 - core index']
  #allocation1 [shape = 'u32[144,128]{1,0:T(1,128)}', space=vmem, size = 0x12000, scoped, tag = 'internal scratch']
  %s0 = inlined_call_operand.hbm [shape: f32[2,16,16,64], index: 0, kind: input, shape index: {}]
  %s1 = inlined_call_operand.vmem [shape: bf16[64,256], index: 1, kind: input, shape index: {}]
  %s2 = inlined_call_operand.vmem [shape: f32[1,256], index: 2, kind: input, shape index: {}]
  %s3 = inlined_call_operand.vmem [shape: f32[3,3,256], index: 3, kind: input, shape index: {}]
  %s4 = inlined_call_operand.vmem [shape: f32[1,256], index: 4, kind: input, shape index: {}]
  %s5 = inlined_call_operand.vmem [shape: bf16[128,64], index: 5, kind: input, shape index: {}]
  %s6 = inlined_call_operand.vmem [shape: f32[1,64], index: 6, kind: input, shape index: {}]
  %s7 = inlined_call_operand.vmem [shape: f32[2,16,16,128], index: 7, kind: output, shape index: {}]
  %s8 = sld [smem:[#allocation0]]
  $region65: #{model_forward.1} parent=0
    _
  %s10 = ssub.s32 1, %s8
  %s11 = scalar_select 0, %s10, %s8
  $region1: #{model_forward.1} parent=0
    #allocation2 [shape = 'u8[262144]{0}', space=vmem, size = 0x40000, scoped, tag = 'input window, operand 0']
    #allocation3 [shape = 's32[2]{0}', space=sflag, size = 0x8, scoped, tag = 'scoped memory for model_forward.1']
    %12 = vsyncpa [#allocation3], 0
    %s13 = scalar_lea.sflag [#allocation3], 1
    %14 = vsyncpa %s13, 0
    loop: start=0, step=1, limit=6
    $region2: #{model_forward.1} parent=1 // loop_pre_header
      _
    $region3: #{model_forward.1} parent=1 // loop_header
      %s16 = sphi 0, %s20
      %p17 = scmp.ge.s32.totalorder %s16, 6
      %s23 = sphi 0, %s35
      %s24 = sphi 0, %s31
      %s25 = sphi 0, %s23
      %s26 = sphi 0, %s24
      %s27 = sphi 0, %s25
      %s28 = sphi 0, %s26
      %s38 = sphi 0, %s40
      %s41 = sphi 0, %s38
      %s42 = sphi 0, %s41
      %s58 = sphi 0, %s42
      %s62 = sphi 0, %s62
      %s64 = sphi 0, %s62
      %s65 = sphi 0, %s64
      %s79 = sphi 0, %s65
      %s83 = sphi 0, %s83
      %s85 = sphi 0, %s83
      %s86 = sphi 0, %s85
      %s100 = sphi 0, %s86
      %s104 = sphi 0, %s104
      %s106 = sphi 0, %s104
      %s107 = sphi 0, %s106
      %s121 = sphi 0, %s107
      %s125 = sphi 0, %s125
      %s127 = sphi 0, %s125
      %s128 = sphi 0, %s127
      %s142 = sphi 0, %s128
      %s146 = sphi 0, %s146
      %s148 = sphi 0, %s146
      %s149 = sphi 0, %s148
      %s163 = sphi 0, %s149
      %s167 = sphi 0, %s167
      %s169 = sphi 0, %s167
      %s170 = sphi 0, %s169
      %s184 = sphi 0, %s170
      %s192 = sphi 0, %s194
      %s195 = sphi 0, %s192
      %s196 = sphi 0, %s195
      %s212 = sphi 0, %s196
    $region4: #{model_forward.1} parent=1 // loop_header_branch
      %19 = sbr.rel (%p17) target = $region8
    $region5: #{model_forward.1} parent=1 // loop_body
      %s21 = ssub.s32 %s16, 1
      %s22 = ssub.s32 %s16, 2
      %s29 = sadd.s32 1, %s24
      %p30 = scmp.ge.s32.totalorder %s29, 2
      %s31 = scalar_select %p30, 0, %s29
      %s32 = sadd.s32 1, %s23
      %s33 = scalar_select %p30, %s32, %s23
      %p34 = scmp.ge.s32.totalorder %s33, 2
      %s35 = scalar_select %p34, 0, %s33
      %s36 = ssub.s32 %s23, %s35
      %p37 = scmp.eq.s32.totalorder %s36, 0
      %s39 = sadd.s32 %s38, 1
      %s40 = scalar_select %p37, %s38, %s39
      %p43 = pneg %p37
      %p44 = scmp.eq.s32.totalorder %s16, 3
      %p45 = por %p43, %p44
      %p46 = scmp.ne.s32.totalorder %s38, %s41
      %p47 = scmp.eq.s32.totalorder %s16, 0
      %p48 = por %p46, %p47
      %p49 = scmp.ne.s32.totalorder %s38, %s41
      %p50 = scmp.eq.s32.totalorder %s21, 3
      %p51 = por %p49, %p50
      %p52 = scmp.ne.s32.totalorder %s41, %s42
      %p53 = scmp.eq.s32.totalorder %s21, 0
      %p54 = por %p52, %p53
      %p55 = scmp.ne.s32.totalorder %s41, %s42
      %p56 = scmp.eq.s32.totalorder %s22, 3
      %p57 = por %p55, %p56
      %p59 = scmp.ne.s32.totalorder %s42, %s58
      %p60 = scmp.eq.s32.totalorder %s22, 0
      %p61 = por %p59, %p60
      %s63 = sadd.s32 %s62, 1
      %p66 = scmp.eq.s32.totalorder %s16, 3
      %p67 = scmp.ne.s32.totalorder %s62, %s64
      %p68 = scmp.eq.s32.totalorder %s16, 0
      %p69 = por %p67, %p68
      %p70 = scmp.ne.s32.totalorder %s62, %s64
      %p71 = scmp.eq.s32.totalorder %s21, 3
      %p72 = por %p70, %p71
      %p73 = scmp.ne.s32.totalorder %s64, %s65
      %p74 = scmp.eq.s32.totalorder %s21, 0
      %p75 = por %p73, %p74
      %p76 = scmp.ne.s32.totalorder %s64, %s65
      %p77 = scmp.eq.s32.totalorder %s22, 3
      %p78 = por %p76, %p77
      %p80 = scmp.ne.s32.totalorder %s65, %s79
      %p81 = scmp.eq.s32.totalorder %s22, 0
      %p82 = por %p80, %p81
      %s84 = sadd.s32 %s83, 1
      %p87 = scmp.eq.s32.totalorder %s16, 3
      %p88 = scmp.ne.s32.totalorder %s83, %s85
      %p89 = scmp.eq.s32.totalorder %s16, 0
      %p90 = por %p88, %p89
      %p91 = scmp.ne.s32.totalorder %s83, %s85
      %p92 = scmp.eq.s32.totalorder %s21, 3
      %p93 = por %p91, %p92
      %p94 = scmp.ne.s32.totalorder %s85, %s86
      %p95 = scmp.eq.s32.totalorder %s21, 0
      %p96 = por %p94, %p95
      %p97 = scmp.ne.s32.totalorder %s85, %s86
      %p98 = scmp.eq.s32.totalorder %s22, 3
      %p99 = por %p97, %p98
      %p101 = scmp.ne.s32.totalorder %s86, %s100
      %p102 = scmp.eq.s32.totalorder %s22, 0
      %p103 = por %p101, %p102
      %s105 = sadd.s32 %s104, 1
      %p108 = scmp.eq.s32.totalorder %s16, 3
      %p109 = scmp.ne.s32.totalorder %s104, %s106
      %p110 = scmp.eq.s32.totalorder %s16, 0
      %p111 = por %p109, %p110
      %p112 = scmp.ne.s32.totalorder %s104, %s106
      %p113 = scmp.eq.s32.totalorder %s21, 3
      %p114 = por %p112, %p113
      %p115 = scmp.ne.s32.totalorder %s106, %s107
      %p116 = scmp.eq.s32.totalorder %s21, 0
      %p117 = por %p115, %p116
      %p118 = scmp.ne.s32.totalorder %s106, %s107
      %p119 = scmp.eq.s32.totalorder %s22, 3
      %p120 = por %p118, %p119
      %p122 = scmp.ne.s32.totalorder %s107, %s121
      %p123 = scmp.eq.s32.totalorder %s22, 0
      %p124 = por %p122, %p123
      %s126 = sadd.s32 %s125, 1
      %p129 = scmp.eq.s32.totalorder %s16, 3
      %p130 = scmp.ne.s32.totalorder %s125, %s127
      %p131 = scmp.eq.s32.totalorder %s16, 0
      %p132 = por %p130, %p131
      %p133 = scmp.ne.s32.totalorder %s125, %s127
      %p134 = scmp.eq.s32.totalorder %s21, 3
      %p135 = por %p133, %p134
      %p136 = scmp.ne.s32.totalorder %s127, %s128
      %p137 = scmp.eq.s32.totalorder %s21, 0
      %p138 = por %p136, %p137
      %p139 = scmp.ne.s32.totalorder %s127, %s128
      %p140 = scmp.eq.s32.totalorder %s22, 3
      %p141 = por %p139, %p140
      %p143 = scmp.ne.s32.totalorder %s128, %s142
      %p144 = scmp.eq.s32.totalorder %s22, 0
      %p145 = por %p143, %p144
      %s147 = sadd.s32 %s146, 1
      %p150 = scmp.eq.s32.totalorder %s16, 3
      %p151 = scmp.ne.s32.totalorder %s146, %s148
      %p152 = scmp.eq.s32.totalorder %s16, 0
      %p153 = por %p151, %p152
      %p154 = scmp.ne.s32.totalorder %s146, %s148
      %p155 = scmp.eq.s32.totalorder %s21, 3
      %p156 = por %p154, %p155
      %p157 = scmp.ne.s32.totalorder %s148, %s149
      %p158 = scmp.eq.s32.totalorder %s21, 0
      %p159 = por %p157, %p158
      %p160 = scmp.ne.s32.totalorder %s148, %s149
      %p161 = scmp.eq.s32.totalorder %s22, 3
      %p162 = por %p160, %p161
      %p164 = scmp.ne.s32.totalorder %s149, %s163
      %p165 = scmp.eq.s32.totalorder %s22, 0
      %p166 = por %p164, %p165
      %s168 = sadd.s32 %s167, 1
      %p171 = scmp.eq.s32.totalorder %s16, 3
      %p172 = scmp.ne.s32.totalorder %s167, %s169
      %p173 = scmp.eq.s32.totalorder %s16, 0
      %p174 = por %p172, %p173
      %p175 = scmp.ne.s32.totalorder %s167, %s169
      %p176 = scmp.eq.s32.totalorder %s21, 3
      %p177 = por %p175, %p176
      %p178 = scmp.ne.s32.totalorder %s169, %s170
      %p179 = scmp.eq.s32.totalorder %s21, 0
      %p180 = por %p178, %p179
      %p181 = scmp.ne.s32.totalorder %s169, %s170
      %p182 = scmp.eq.s32.totalorder %s22, 3
      %p183 = por %p181, %p182
      %p185 = scmp.ne.s32.totalorder %s170, %s184
      %p186 = scmp.eq.s32.totalorder %s22, 0
      %p187 = por %p185, %p186
      %s188 = ssub.s32 %s23, %s35
      %s189 = ssub.s32 %s24, %s31
      %s190 = sor.u32 %s188, %s189
      %p191 = scmp.eq.s32.totalorder %s190, 0
      %s193 = sadd.s32 %s192, 1
      %s194 = scalar_select %p191, %s192, %s193
      %p197 = pneg %p191
      %p198 = scmp.eq.s32.totalorder %s16, 3
      %p199 = por %p197, %p198
      %p200 = scmp.ne.s32.totalorder %s192, %s195
      %p201 = scmp.eq.s32.totalorder %s16, 0
      %p202 = por %p200, %p201
      %p203 = scmp.ne.s32.totalorder %s192, %s195
      %p204 = scmp.eq.s32.totalorder %s21, 3
      %p205 = por %p203, %p204
      %p206 = scmp.ne.s32.totalorder %s195, %s196
      %p207 = scmp.eq.s32.totalorder %s21, 0
      %p208 = por %p206, %p207
      %p209 = scmp.ne.s32.totalorder %s195, %s196
      %p210 = scmp.eq.s32.totalorder %s22, 3
      %p211 = por %p209, %p210
      %p213 = scmp.ne.s32.totalorder %s196, %s212
      %p214 = scmp.eq.s32.totalorder %s22, 0
      %p215 = por %p213, %p214
      %p216 = scmp.le.s32.totalorder 1, %s16
      %p217 = scmp.lt.s32.totalorder %s16, 5
      %p218 = pnand %p216, %p217
      %p219 = pneg %p218
      // Predicated region
      $region9: #{model_forward.1} parent=5 // pred_check
        _
      $region10: #{model_forward.1} parent=5 // pred_check_branch
        %221 = sbr.rel (%p218) target = $region12
      $region11: #{model_forward.1} parent=5 // pred_region
        %s222 = ssub.s32 %s16, 1
        // Predicated region
        $region13: #{model_forward.1} parent=11 // pred_check
          %p223 = pneg %p75
        $region14: #{model_forward.1} parent=11 // pred_check_branch
          %225 = sbr.rel (%p223) target = $region16
        $region15: #{model_forward.1} parent=11 // pred_region
          _
        $region16: #{model_forward.1} parent=11 // pred_fallthru
          _
        // Predicated region
        $region17: #{model_forward.1} parent=11 // pred_check
          %p226 = pneg %p96
        $region18: #{model_forward.1} parent=11 // pred_check_branch
          %228 = sbr.rel (%p226) target = $region20
        $region19: #{model_forward.1} parent=11 // pred_region
          _
        $region20: #{model_forward.1} parent=11 // pred_fallthru
          _
        // Predicated region
        $region21: #{model_forward.1} parent=11 // pred_check
          %p229 = pneg %p117
        $region22: #{model_forward.1} parent=11 // pred_check_branch
          %231 = sbr.rel (%p229) target = $region24
        $region23: #{model_forward.1} parent=11 // pred_region
          _
        $region24: #{model_forward.1} parent=11 // pred_fallthru
          _
        // Predicated region
        $region25: #{model_forward.1} parent=11 // pred_check
          %p232 = pneg %p138
        $region26: #{model_forward.1} parent=11 // pred_check_branch
          %234 = sbr.rel (%p232) target = $region28
        $region27: #{model_forward.1} parent=11 // pred_region
          _
        $region28: #{model_forward.1} parent=11 // pred_fallthru
          _
        // Predicated region
        $region29: #{model_forward.1} parent=11 // pred_check
          %p235 = pneg %p159
        $region30: #{model_forward.1} parent=11 // pred_check_branch
          %237 = sbr.rel (%p235) target = $region32
        $region31: #{model_forward.1} parent=11 // pred_region
          _
        $region32: #{model_forward.1} parent=11 // pred_fallthru
          _
        // Predicated region
        $region33: #{model_forward.1} parent=11 // pred_check
          %p238 = pneg %p180
        $region34: #{model_forward.1} parent=11 // pred_check_branch
          %240 = sbr.rel (%p238) target = $region36
        $region35: #{model_forward.1} parent=11 // pred_region
          _
        $region36: #{model_forward.1} parent=11 // pred_fallthru
          _
      $region12: #{model_forward.1} parent=5 // pred_fallthru
        _
      %p241 = scmp.lt.s32.totalorder %s16, 4
      // Predicated region
      $region37: #{model_forward.1} parent=5 // pred_check
        %p242 = pneg %p241
      $region38: #{model_forward.1} parent=5 // pred_check_branch
        %244 = sbr.rel (%p242) target = $region40
      $region39: #{model_forward.1} parent=5 // pred_region
        // Predicated region
        $region41: #{model_forward.1} parent=39 // pred_check
          %p245 = pneg %p48
        $region42: #{model_forward.1} parent=39 // pred_check_branch
          %247 = sbr.rel (%p245) target = $region44
        $region43: #{model_forward.1} parent=39 // pred_region
          %s248 = sand.u32 %s38, 1
          %s249 = scalar_lea.sflag [#allocation3], %s248
          %s250 = sand.u32 %s38, 1
          %s251 = smul.addr %s250, 256
          %s252 = scalar_lea.vmem [#allocation2], %s251
          %s254 = ssub.s32 4096, 4096
          %255 = vsyncadd %s249, %s254
          %s256 = smul.addr %s23, 32
          %s257 = smul.addr %s256, 128
          %s258 = scalar_lea.hbm %s0, %s257
          %s259 = sshll.u32 %s252, 4
          %s260 = int_to_ptr.vmem [resolvable:$true] %s259
          %265 = dma.hbm_to_vmem [thread:$0]  %s258, 4096, %s260, %s249, 128, 128, 8
        $region44: #{model_forward.1} parent=39 // pred_fallthru
          _
      $region40: #{model_forward.1} parent=5 // pred_fallthru
        _
      %p266 = scmp.le.s32.totalorder 1, %s16
      %p267 = scmp.lt.s32.totalorder %s16, 5
      %p268 = pnand %p266, %p267
      %p269 = pneg %p268
      // Predicated region
      $region45: #{model_forward.1} parent=5 // pred_check
        _
      $region46: #{model_forward.1} parent=5 // pred_check_branch
        %271 = sbr.rel (%p268) target = $region48
      $region47: #{model_forward.1} parent=5 // pred_region
        %s272 = ssub.s32 %s16, 1
        %s273 = sand.u32 %s41, 1
        %s274 = scalar_lea.sflag [#allocation3], %s273
        %s275 = sand.u32 %s41, 1
        %s276 = smul.addr %s275, 256
        %s277 = scalar_lea.vmem [#allocation2], %s276
        // Predicated region
        $region49: #{model_forward.1} parent=47 // pred_check
          %p278 = pneg %p54
        $region50: #{model_forward.1} parent=47 // pred_check_branch
          %280 = sbr.rel (%p278) target = $region52
        $region51: #{model_forward.1} parent=47 // pred_region
          %281 = dma.done %s274, 4096
        $region52: #{model_forward.1} parent=47 // pred_fallthru
          _
        %s282 = sand.u32 %s41, 1
        %s283 = scalar_lea.sflag [#allocation3], %s282
        %s284 = sand.u32 %s41, 1
        %s285 = smul.addr %s284, 256
        %s286 = scalar_lea.vmem [#allocation2], %s285
        %p287 = pneg %p54
        %p288 = pneg %p51
        %p289 = pneg %p75
        %p290 = pneg %p72
        %p291 = pneg %p96
        %p292 = pneg %p93
        %p293 = pneg %p117
        %p294 = pneg %p114
        %p295 = pneg %p138
        %p296 = pneg %p135
        %p297 = pneg %p159
        %p298 = pneg %p156
        %p299 = pneg %p180
        %p300 = pneg %p177
        %p301 = pneg %p208
        %p302 = pneg %p205
        %s303 = smul.u32 8, %s26
        %p304 = scmp.lt.s32.totalorder %s25, 1
        %s305 = scalar_select %p304, %s25, 1
        %p306 = scmp.lt.s32.totalorder %s303, 15
        %s307 = scalar_select %p306, %s303, 15
        %s308 = smul.addr %s307, 2
        %s309 = smul.addr %s305, 32
        %s310 = sadd.s32 %s308, %s309
        %s311 = smul.addr %s310, 8
        %s312 = scalar_lea.vmem %s7, %s311
        %s313 = smul.u32 8, %s26
        %p314 = scmp.lt.s32.totalorder %s25, 1
        %s315 = scalar_select %p314, %s25, 1
        %p316 = scmp.lt.s32.totalorder %s313, 15
        %s317 = scalar_select %p316, %s313, 15
        %s318 = smul.addr %s317, 2
        %s319 = smul.addr %s315, 32
        %s320 = sadd.s32 %s318, %s319
        %s321 = smul.addr %s320, 8
        %s322 = scalar_lea.vmem %s7, %s321
        %s323 = smul.u32 8, %s26
        %s325 = smul.u32 %s26, 8
        %s326 = smul.u32 %s325, 16
        %s327 = scalar_lea.vmem %s277, %s326 [#allocation2]
        %v328 = vld [vmem:[%s327] sm:$0xff]
        %v329 = vld [vmem:[%s327 + $0x8] sm:$0xff]
        %v330 = vld [vmem:[%s327 + $0x10] sm:$0xff]
        %v331 = vld [vmem:[%s327 + $0x18] sm:$0xff]
        %v332 = vld [vmem:[%s327 + $0x20] sm:$0xff]
        %v333 = vld [vmem:[%s327 + $0x28] sm:$0xff]
        %v334 = vld [vmem:[%s327 + $0x30] sm:$0xff]
        %v335 = vld [vmem:[%s327 + $0x38] sm:$0xff]
        %v336 = vld [vmem:[%s327 + $0x40] sm:$0xff]
        %v337 = vld [vmem:[%s327 + $0x48] sm:$0xff]
        %v338 = vld [vmem:[%s327 + $0x50] sm:$0xff]
        %v339 = vld [vmem:[%s327 + $0x58] sm:$0xff]
        %v340 = vld [vmem:[%s327 + $0x60] sm:$0xff]
        %v341 = vld [vmem:[%s327 + $0x68] sm:$0xff]
        %v342 = vld [vmem:[%s327 + $0x70] sm:$0xff]
        %v343 = vld [vmem:[%s327 + $0x78] sm:$0xff]
        %s344 = ssub.s32 %s325, 1
        %p345 = scmp.gt.s32.totalorder %s344, 0
        %s346 = scalar_select %p345, %s344, 0
        %s347 = smul.u32 %s346, 16
        %s348 = scalar_lea.vmem %s277, %s347 [#allocation2]
        %v349 = vld [vmem:[%s348] sm:$0xff]
        %v350 = vld [vmem:[%s348 + $0x8] sm:$0xff]
        %s351 = sadd.s32 %s325, 8
        %p352 = scmp.lt.s32.totalorder %s351, 15
        %s353 = scalar_select %p352, %s351, 15
        %s354 = smul.u32 %s353, 16
        %s355 = scalar_lea.vmem %s277, %s354 [#allocation2]
        %v356 = vld [vmem:[%s355] sm:$0xff]
        %v357 = vld [vmem:[%s355 + $0x8] sm:$0xff]
        %v358 = vpack.c.bf16 %v350, %v349
        %v359 = vpack.c.bf16 %v329, %v328
        %v360 = vpack.c.bf16 %v331, %v330
        %v361 = vpack.c.bf16 %v333, %v332
        %v362 = vpack.c.bf16 %v335, %v334
        %v363 = vpack.c.bf16 %v337, %v336
        %v364 = vpack.c.bf16 %v339, %v338
        %v365 = vpack.c.bf16 %v341, %v340
        %v366 = vpack.c.bf16 %v343, %v342
        %v367 = vpack.c.bf16 %v357, %v356
        %v368 = vld [vmem:[%s1] sm:$0xff]
        %v369 = vld [vmem:[%s1 + $0x8] sm:$0xff]
        %v370 = vld [vmem:[%s1 + $0x10] sm:$0xff]
        %v371 = vld [vmem:[%s1 + $0x18] sm:$0xff]
        %v372 = vld [vmem:[%s1 + $0x20] sm:$0xff]
        %v373 = vld [vmem:[%s1 + $0x28] sm:$0xff]
        %v374 = vld [vmem:[%s1 + $0x30] sm:$0xff]
        %v375 = vld [vmem:[%s1 + $0x38] sm:$0xff]
        %v376 = vld [vmem:[%s2] sm:$0x3]
        %v378 = vlaneseq
        %v379 = vshrl.u32 %v378, 7
        %v380 = vsub.s32 0, %v379
        %v381 = vrot.slane %v376, %v380
        %v382 = vlaneseq
        %v383 = vshrl.u32 %v382, 7
        %v384 = vsub.s32 1, %v383
        %v385 = vrot.slane %v376, %v384
        %v396 = vunpack.c.l.b16 %v368
        %v397 = vunpack.c.h.b16 %v368
        %v398 = vunpack.c.l.b16 %v369
        %v399 = vunpack.c.h.b16 %v369
        %v400 = vunpack.c.l.b16 %v370
        %v401 = vunpack.c.h.b16 %v370
        %v402 = vunpack.c.l.b16 %v371
        %v403 = vunpack.c.h.b16 %v371
        %v404 = vunpack.c.l.b16 %v372
        %v405 = vunpack.c.h.b16 %v372
        %v406 = vunpack.c.l.b16 %v373
        %v407 = vunpack.c.h.b16 %v373
        %v408 = vunpack.c.l.b16 %v374
        %v409 = vunpack.c.h.b16 %v374
        %v410 = vunpack.c.l.b16 %v375
        %v411 = vunpack.c.h.b16 %v375
        %v412 = vpack.c.b16 %v398, %v396
        %v413 = vpack.c.b16 %v399, %v397
        %v414 = vpack.c.b16 %v402, %v400
        %v415 = vpack.c.b16 %v403, %v401
        %v416 = vpack.c.b16 %v406, %v404
        %v417 = vpack.c.b16 %v407, %v405
        %v418 = vpack.c.b16 %v410, %v408
        %v419 = vpack.c.b16 %v411, %v409
        %vm428 = vcmask 523264
        %v430 = vsel %vm428, %v358, 0
        %v433 = vsel %vm428, %v359, 0
        %v436 = vsel %vm428, %v360, 0
        %v439 = vsel %vm428, %v361, 0
        %v442 = vsel %vm428, %v362, 0
        %v445 = vsel %vm428, %v363, 0
        %v448 = vsel %vm428, %v364, 0
        %v451 = vsel %vm428, %v365, 0
        %v454 = vsel %vm428, %v366, 0
        %v457 = vsel %vm428, %v367, 0
        %459 = vmatprep.subr.bf16.mxu0 %v413
        %460 = vmatpush1.bf16.msra.mxu0 %v412
        %461 = vmatprep.subr.bf16.mxu0 %v415
        %462 = vmatpush1.bf16.msra.mxu0 %v414
        %463 = vmatprep.subr.bf16.mxu0 %v417
        %464 = vmatpush1.bf16.msra.mxu0 %v416
        %465 = vmatprep.subr.bf16.mxu0 %v419
        %466 = vmatpush1.bf16.msra.mxu0 %v418
        %467 = vmatprep.subr.bf16.mxu0 0
        %468 = vmatpush1.bf16.msra.mxu0 0
        %469 = vmatprep.subr.bf16.mxu0 0
        %470 = vmatpush1.bf16.msra.mxu0 0
        %471 = vmatprep.subr.bf16.mxu0 0
        %472 = vmatpush1.bf16.msra.mxu0 0
        %473 = vmatprep.subr.bf16.mxu0 0
        %474 = vmatpush1.bf16.msra.mxu0 0
        %475 = vmatprep.subr.bf16.mxu0 0
        %476 = vmatpush1.bf16.msra.mxu0 0
        %477 = vmatprep.subr.bf16.mxu0 0
        %478 = vmatpush1.bf16.msra.mxu0 0
        %479 = vmatprep.subr.bf16.mxu0 0
        %480 = vmatpush1.bf16.msra.mxu0 0
        %481 = vmatprep.subr.bf16.mxu0 0
        %482 = vmatpush1.bf16.msra.mxu0 0
        %483 = vmatprep.subr.bf16.mxu0 0
        %484 = vmatpush1.bf16.msra.mxu0 0
        %485 = vmatprep.subr.bf16.mxu0 0
        %486 = vmatpush1.bf16.msra.mxu0 0
        %487 = vmatprep.subr.bf16.mxu0 0
        %488 = vmatpush1.bf16.msra.mxu0 0
        %489 = vmatprep.subr.bf16.mxu0 0
        %490 = vmatpush1.bf16.msra.mxu0 0
        %491 = vmatprep.mubr.bf16.mxu0 0
        %492 = vmatmul.mubr.bf16.gmra.mrb[0].mxu0 %v430
        %v493 = vpop.f32.mrb[0].mxu0
        %v494 = vadd.f32 %v381, %v493
        %v495 = vpop.f32.mrb[0].mxu0
        %v496 = vadd.f32 %v385, %v495
        %v497 = vpop.f32.mrb[0].mxu0
        %v498 = vadd.f32 %v381, %v497
        %v499 = vpop.f32.mrb[0].mxu0
        %v500 = vadd.f32 %v385, %v499
        %501 = vmatprep.mubr.bf16.mxu0 0
        %502 = vmatmul.mubr.bf16.gmra.mrb[0].mxu0 %v433
        %v503 = vpop.f32.mrb[0].mxu0
        %v504 = vadd.f32 %v381, %v503
        %v505 = vpop.f32.mrb[0].mxu0
        %v506 = vadd.f32 %v385, %v505
        %v507 = vpop.f32.mrb[0].mxu0
        %v508 = vadd.f32 %v381, %v507
        %v509 = vpop.f32.mrb[0].mxu0
        %v510 = vadd.f32 %v385, %v509
        %511 = vmatprep.mubr.bf16.mxu0 0
        %512 = vmatmul.mubr.bf16.gmra.mrb[0].mxu0 %v436
        %v513 = vpop.f32.mrb[0].mxu0
        %v514 = vadd.f32 %v381, %v513
        %v515 = vpop.f32.mrb[0].mxu0
        %v516 = vadd.f32 %v385, %v515
        %v517 = vpop.f32.mrb[0].mxu0
        %v518 = vadd.f32 %v381, %v517
        %v519 = vpop.f32.mrb[0].mxu0
        %v520 = vadd.f32 %v385, %v519
        %521 = vmatprep.mubr.bf16.mxu0 0
        %522 = vmatmul.mubr.bf16.gmra.mrb[0].mxu0 %v439
        %v523 = vpop.f32.mrb[0].mxu0
        %v524 = vadd.f32 %v381, %v523
        %v525 = vpop.f32.mrb[0].mxu0
        %v526 = vadd.f32 %v385, %v525
        %v527 = vpop.f32.mrb[0].mxu0
        %v528 = vadd.f32 %v381, %v527
        %v529 = vpop.f32.mrb[0].mxu0
        %v530 = vadd.f32 %v385, %v529
        %531 = vmatprep.mubr.bf16.mxu0 0
        %532 = vmatmul.mubr.bf16.gmra.mrb[0].mxu0 %v442
        %v533 = vpop.f32.mrb[0].mxu0
        %v534 = vadd.f32 %v381, %v533
        %v535 = vpop.f32.mrb[0].mxu0
        %v536 = vadd.f32 %v385, %v535
        %v537 = vpop.f32.mrb[0].mxu0
        %v538 = vadd.f32 %v381, %v537
        %v539 = vpop.f32.mrb[0].mxu0
        %v540 = vadd.f32 %v385, %v539
        %541 = vmatprep.mubr.bf16.mxu0 0
        %542 = vmatmul.mubr.bf16.gmra.mrb[0].mxu0 %v445
        %v543 = vpop.f32.mrb[0].mxu0
        %v544 = vadd.f32 %v381, %v543
        %v545 = vpop.f32.mrb[0].mxu0
        %v546 = vadd.f32 %v385, %v545
        %v547 = vpop.f32.mrb[0].mxu0
        %v548 = vadd.f32 %v381, %v547
        %v549 = vpop.f32.mrb[0].mxu0
        %v550 = vadd.f32 %v385, %v549
        %551 = vmatprep.mubr.bf16.mxu0 0
        %552 = vmatmul.mubr.bf16.gmra.mrb[0].mxu0 %v448
        %v553 = vpop.f32.mrb[0].mxu0
        %v554 = vadd.f32 %v381, %v553
        %v555 = vpop.f32.mrb[0].mxu0
        %v556 = vadd.f32 %v385, %v555
        %v557 = vpop.f32.mrb[0].mxu0
        %v558 = vadd.f32 %v381, %v557
        %v559 = vpop.f32.mrb[0].mxu0
        %v560 = vadd.f32 %v385, %v559
        %561 = vmatprep.mubr.bf16.mxu0 0
        %562 = vmatmul.mubr.bf16.gmra.mrb[0].mxu0 %v451
        %v563 = vpop.f32.mrb[0].mxu0
        %v564 = vadd.f32 %v381, %v563
        %v565 = vpop.f32.mrb[0].mxu0
        %v566 = vadd.f32 %v385, %v565
        %v567 = vpop.f32.mrb[0].mxu0
        %v568 = vadd.f32 %v381, %v567
        %v569 = vpop.f32.mrb[0].mxu0
        %v570 = vadd.f32 %v385, %v569
        %571 = vmatprep.mubr.bf16.mxu0 0
        %572 = vmatmul.mubr.bf16.gmra.mrb[0].mxu0 %v454
        %v573 = vpop.f32.mrb[0].mxu0
        %v574 = vadd.f32 %v381, %v573
        %v575 = vpop.f32.mrb[0].mxu0
        %v576 = vadd.f32 %v385, %v575
        %v577 = vpop.f32.mrb[0].mxu0
        %v578 = vadd.f32 %v381, %v577
        %v579 = vpop.f32.mrb[0].mxu0
        %v580 = vadd.f32 %v385, %v579
        %581 = vmatprep.mubr.bf16.mxu0 0
        %582 = vmatmul.mubr.bf16.gmra.mrb[0].mxu0 %v457
        %v583 = vpop.f32.mrb[0].mxu0
        %v584 = vadd.f32 %v381, %v583
        %v585 = vpop.f32.mrb[0].mxu0
        %v586 = vadd.f32 %v385, %v585
        %v587 = vpop.f32.mrb[0].mxu0
        %v588 = vadd.f32 %v381, %v587
        %v589 = vpop.f32.mrb[0].mxu0
        %v590 = vadd.f32 %v385, %v589
        %591 = vdwg.mxu0
        %p592 = scmp.gt.s32.totalorder %s325, 0
        %s593 = scalar_select %p592, 1, 0
        %s594 = scvt.s32.f32 %s593
        %p595 = scmp.lt.s32.totalorder %s351, 16
        %s596 = scalar_select %p595, 1, 0
        %s597 = scvt.s32.f32 %s596
        %v598 = vstv %s597
        %v599 = vstv %s594
        %v600 = vmul.f32 %v494, %v599
        %v601 = vmul.f32 %v496, %v599
        %v602 = vmul.f32 %v498, %v599
        %v603 = vmul.f32 %v500, %v599
        %v604 = vmul.f32 %v584, %v598
        %v605 = vmul.f32 %v586, %v598
        %v606 = vmul.f32 %v588, %v598
        %v607 = vmul.f32 %v590, %v598
        %v608 = vlaneseq
        %v609 = vshrl.u32 %v608, 7
        %v610 = vadd.s32 %v609, 8
        %vm611 = vcmp.gt.s32.totalorder %v609, 0
        %vm612 = vcmp.gt.s32.totalorder %v610, 0
        %v613 = vsel %vm611, 1, 0
        %v614 = vsel %vm612, 1, 0
        %v615 = vcvt.s32.f32 %v613
        %v616 = vcvt.s32.f32 %v614
        %vm617 = vcmp.lt.s32.totalorder %v609, 15
        %vm618 = vcmp.lt.s32.totalorder %v610, 15
        %v619 = vsel %vm617, 1, 0
        %v620 = vsel %vm618, 1, 0
        %v621 = vcvt.s32.f32 %v619
        %v622 = vcvt.s32.f32 %v620
        %v623 = vrot.slane %v600, 7
        %v624 = vrot.slane %v601, 7
        %v625 = vrot.slane %v504, 7
        %v626 = vrot.slane %v506, 7
        %v627 = vrot.slane %v514, 7
        %v628 = vrot.slane %v516, 7
        %v629 = vrot.slane %v524, 7
        %v630 = vrot.slane %v526, 7
        %v631 = vrot.slane %v534, 7
        %v632 = vrot.slane %v536, 7
        %v633 = vrot.slane %v544, 7
        %v634 = vrot.slane %v546, 7
        %v635 = vrot.slane %v554, 7
        %v636 = vrot.slane %v556, 7
        %v637 = vrot.slane %v564, 7
        %v638 = vrot.slane %v566, 7
        %v639 = vrot.slane %v574, 7
        %v640 = vrot.slane %v576, 7
        %v641 = vrot.slane %v604, 7
        %v642 = vrot.slane %v605, 7
        %v643 = vrot.slane %v602, 7
        %v644 = vrot.slane %v603, 7
        %v645 = vrot.slane %v508, 7
        %v646 = vrot.slane %v510, 7
        %v647 = vrot.slane %v518, 7
        %v648 = vrot.slane %v520, 7
        %v649 = vrot.slane %v528, 7
        %v650 = vrot.slane %v530, 7
        %v651 = vrot.slane %v538, 7
        %v652 = vrot.slane %v540, 7
        %v653 = vrot.slane %v548, 7
        %v654 = vrot.slane %v550, 7
        %v655 = vrot.slane %v558, 7
        %v656 = vrot.slane %v560, 7
        %v657 = vrot.slane %v568, 7
        %v658 = vrot.slane %v570, 7
        %v659 = vrot.slane %v578, 7
        %v660 = vrot.slane %v580, 7
        %v661 = vrot.slane %v606, 7
        %v662 = vrot.slane %v607, 7
        %vm663 = vcmp.lt.s32.totalorder %v609, 1
        %v664 = vsel %vm663, %v623, %v643
        %v665 = vsel %vm663, %v624, %v644
        %v666 = vsel %vm663, %v625, %v645
        %v667 = vsel %vm663, %v626, %v646
        %v668 = vsel %vm663, %v627, %v647
        %v669 = vsel %vm663, %v628, %v648
        %v670 = vsel %vm663, %v629, %v649
        %v671 = vsel %vm663, %v630, %v650
        %v672 = vsel %vm663, %v631, %v651
        %v673 = vsel %vm663, %v632, %v652
        %v674 = vsel %vm663, %v633, %v653
        %v675 = vsel %vm663, %v634, %v654
        %v676 = vsel %vm663, %v635, %v655
        %v677 = vsel %vm663, %v636, %v656
        %v678 = vsel %vm663, %v637, %v657
        %v679 = vsel %vm663, %v638, %v658
        %v680 = vsel %vm663, %v639, %v659
        %v681 = vsel %vm663, %v640, %v660
        %v682 = vsel %vm663, %v641, %v661
        %v683 = vsel %vm663, %v642, %v662
        %v684 = vsel %vm663, %v643, %v623
        %v685 = vsel %vm663, %v644, %v624
        %v686 = vsel %vm663, %v645, %v625
        %v687 = vsel %vm663, %v646, %v626
        %v688 = vsel %vm663, %v647, %v627
        %v689 = vsel %vm663, %v648, %v628
        %v690 = vsel %vm663, %v649, %v629
        %v691 = vsel %vm663, %v650, %v630
        %v692 = vsel %vm663, %v651, %v631
        %v693 = vsel %vm663, %v652, %v632
        %v694 = vsel %vm663, %v653, %v633
        %v695 = vsel %vm663, %v654, %v634
        %v696 = vsel %vm663, %v655, %v635
        %v697 = vsel %vm663, %v656, %v636
        %v698 = vsel %vm663, %v657, %v637
        %v699 = vsel %vm663, %v658, %v638
        %v700 = vsel %vm663, %v659, %v639
        %v701 = vsel %vm663, %v660, %v640
        %v702 = vsel %vm663, %v661, %v641
        %v703 = vsel %vm663, %v662, %v642
        %v704 = vmul.f32 %v684, %v615
        %v705 = vmul.f32 %v685, %v615
        %v706 = vmul.f32 %v664, %v616
        %v707 = vmul.f32 %v665, %v616
        %v708 = vmul.f32 %v686, %v615
        %v709 = vmul.f32 %v687, %v615
        %v710 = vmul.f32 %v666, %v616
        %v711 = vmul.f32 %v667, %v616
        %v712 = vmul.f32 %v688, %v615
        %v713 = vmul.f32 %v689, %v615
        %v714 = vmul.f32 %v668, %v616
        %v715 = vmul.f32 %v669, %v616
        %v716 = vmul.f32 %v690, %v615
        %v717 = vmul.f32 %v691, %v615
        %v718 = vmul.f32 %v670, %v616
        %v719 = vmul.f32 %v671, %v616
        %v720 = vmul.f32 %v692, %v615
        %v721 = vmul.f32 %v693, %v615
        %v722 = vmul.f32 %v672, %v616
        %v723 = vmul.f32 %v673, %v616
        %v724 = vmul.f32 %v694, %v615
        %v725 = vmul.f32 %v695, %v615
        %v726 = vmul.f32 %v674, %v616
        %v727 = vmul.f32 %v675, %v616
        %v728 = vmul.f32 %v696, %v615
        %v729 = vmul.f32 %v697, %v615
        %v730 = vmul.f32 %v676, %v616
        %v731 = vmul.f32 %v677, %v616
        %v732 = vmul.f32 %v698, %v615
        %v733 = vmul.f32 %v699, %v615
        %v734 = vmul.f32 %v678, %v616
        %v735 = vmul.f32 %v679, %v616
        %v736 = vmul.f32 %v700, %v615
        %v737 = vmul.f32 %v701, %v615
        %v738 = vmul.f32 %v680, %v616
        %v739 = vmul.f32 %v681, %v616
        %v740 = vmul.f32 %v702, %v615
        %v741 = vmul.f32 %v703, %v615
        %v742 = vmul.f32 %v682, %v616
        %v743 = vmul.f32 %v683, %v616
        %v744 = vrot.slane %v600, 1
        %v745 = vrot.slane %v601, 1
        %v746 = vrot.slane %v504, 1
        %v747 = vrot.slane %v506, 1
        %v748 = vrot.slane %v514, 1
        %v749 = vrot.slane %v516, 1
        %v750 = vrot.slane %v524, 1
        %v751 = vrot.slane %v526, 1
        %v752 = vrot.slane %v534, 1
        %v753 = vrot.slane %v536, 1
        %v754 = vrot.slane %v544, 1
        %v755 = vrot.slane %v546, 1
        %v756 = vrot.slane %v554, 1
        %v757 = vrot.slane %v556, 1
        %v758 = vrot.slane %v564, 1
        %v759 = vrot.slane %v566, 1
        %v760 = vrot.slane %v574, 1
        %v761 = vrot.slane %v576, 1
        %v762 = vrot.slane %v604, 1
        %v763 = vrot.slane %v605, 1
        %v764 = vrot.slane %v602, 1
        %v765 = vrot.slane %v603, 1
        %v766 = vrot.slane %v508, 1
        %v767 = vrot.slane %v510, 1
        %v768 = vrot.slane %v518, 1
        %v769 = vrot.slane %v520, 1
        %v770 = vrot.slane %v528, 1
        %v771 = vrot.slane %v530, 1
        %v772 = vrot.slane %v538, 1
        %v773 = vrot.slane %v540, 1
        %v774 = vrot.slane %v548, 1
        %v775 = vrot.slane %v550, 1
        %v776 = vrot.slane %v558, 1
        %v777 = vrot.slane %v560, 1
        %v778 = vrot.slane %v568, 1
        %v779 = vrot.slane %v570, 1
        %v780 = vrot.slane %v578, 1
        %v781 = vrot.slane %v580, 1
        %v782 = vrot.slane %v606, 1
        %v783 = vrot.slane %v607, 1
        %vm784 = vcmp.lt.s32.totalorder %v609, 7
        %v785 = vsel %vm784, %v744, %v764
        %v786 = vsel %vm784, %v745, %v765
        %v787 = vsel %vm784, %v746, %v766
        %v788 = vsel %vm784, %v747, %v767
        %v789 = vsel %vm784, %v748, %v768
        %v790 = vsel %vm784, %v749, %v769
        %v791 = vsel %vm784, %v750, %v770
        %v792 = vsel %vm784, %v751, %v771
        %v793 = vsel %vm784, %v752, %v772
        %v794 = vsel %vm784, %v753, %v773
        %v795 = vsel %vm784, %v754, %v774
        %v796 = vsel %vm784, %v755, %v775
        %v797 = vsel %vm784, %v756, %v776
        %v798 = vsel %vm784, %v757, %v777
        %v799 = vsel %vm784, %v758, %v778
        %v800 = vsel %vm784, %v759, %v779
        %v801 = vsel %vm784, %v760, %v780
        %v802 = vsel %vm784, %v761, %v781
        %v803 = vsel %vm784, %v762, %v782
        %v804 = vsel %vm784, %v763, %v783
        %v805 = vsel %vm784, %v764, %v744
        %v806 = vsel %vm784, %v765, %v745
        %v807 = vsel %vm784, %v766, %v746
        %v808 = vsel %vm784, %v767, %v747
        %v809 = vsel %vm784, %v768, %v748
        %v810 = vsel %vm784, %v769, %v749
        %v811 = vsel %vm784, %v770, %v750
        %v812 = vsel %vm784, %v771, %v751
        %v813 = vsel %vm784, %v772, %v752
        %v814 = vsel %vm784, %v773, %v753
        %v815 = vsel %vm784, %v774, %v754
        %v816 = vsel %vm784, %v775, %v755
        %v817 = vsel %vm784, %v776, %v756
        %v818 = vsel %vm784, %v777, %v757
        %v819 = vsel %vm784, %v778, %v758
        %v820 = vsel %vm784, %v779, %v759
        %v821 = vsel %vm784, %v780, %v760
        %v822 = vsel %vm784, %v781, %v761
        %v823 = vsel %vm784, %v782, %v762
        %v824 = vsel %vm784, %v783, %v763
        %v825 = vmul.f32 %v785, %v621
        %v826 = vmul.f32 %v786, %v621
        %v827 = vmul.f32 %v805, %v622
        %v828 = vmul.f32 %v806, %v622
        %v829 = vmul.f32 %v787, %v621
        %v830 = vmul.f32 %v788, %v621
        %v831 = vmul.f32 %v807, %v622
        %v832 = vmul.f32 %v808, %v622
        %v833 = vmul.f32 %v789, %v621
        %v834 = vmul.f32 %v790, %v621
        %v835 = vmul.f32 %v809, %v622
        %v836 = vmul.f32 %v810, %v622
        %v837 = vmul.f32 %v791, %v621
        %v838 = vmul.f32 %v792, %v621
        %v839 = vmul.f32 %v811, %v622
        %v840 = vmul.f32 %v812, %v622
        %v841 = vmul.f32 %v793, %v621
        %v842 = vmul.f32 %v794, %v621
        %v843 = vmul.f32 %v813, %v622
        %v844 = vmul.f32 %v814, %v622
        %v845 = vmul.f32 %v795, %v621
        %v846 = vmul.f32 %v796, %v621
        %v847 = vmul.f32 %v815, %v622
        %v848 = vmul.f32 %v816, %v622
        %v849 = vmul.f32 %v797, %v621
        %v850 = vmul.f32 %v798, %v621
        %v851 = vmul.f32 %v817, %v622
        %v852 = vmul.f32 %v818, %v622
        %v853 = vmul.f32 %v799, %v621
        %v854 = vmul.f32 %v800, %v621
        %v855 = vmul.f32 %v819, %v622
        %v856 = vmul.f32 %v820, %v622
        %v857 = vmul.f32 %v801, %v621
        %v858 = vmul.f32 %v802, %v621
        %v859 = vmul.f32 %v821, %v622
        %v860 = vmul.f32 %v822, %v622
        %v861 = vmul.f32 %v803, %v621
        %v862 = vmul.f32 %v804, %v621
        %v863 = vmul.f32 %v823, %v622
        %v864 = vmul.f32 %v824, %v622
        %v865 = vld [vmem:[%s3] sm:$0x77]
        %v866 = vld [vmem:[%s3 + $0x8] sm:$0x77]
        %v867 = vld [vmem:[%s3 + $0x10] sm:$0x77]
        %v868 = vld [vmem:[%s4] sm:$0x3]
        %v870 = vlaneseq
        %v871 = vshrl.u32 %v870, 7
        %v872 = vsub.s32 0, %v871
        %v873 = vrot.slane %v865, %v872
        %v874 = vlaneseq
        %v875 = vshrl.u32 %v874, 7
        %v876 = vsub.s32 4, %v875
        %v877 = vrot.slane %v865, %v876
        %v880 = vlaneseq
        %v881 = vshrl.u32 %v880, 7
        %v882 = vsub.s32 0, %v881
        %v883 = vrot.slane %v873, %v882
        %v884 = vlaneseq
        %v885 = vshrl.u32 %v884, 7
        %v886 = vsub.s32 0, %v885
        %v887 = vrot.slane %v877, %v886
        %v888 = vmul.f32 %v704, %v883
        %v889 = vmul.f32 %v705, %v887
        %v890 = vmul.f32 %v706, %v883
        %v891 = vmul.f32 %v707, %v887
        %v892 = vmul.f32 %v708, %v883
        %v893 = vmul.f32 %v709, %v887
        %v894 = vmul.f32 %v710, %v883
        %v895 = vmul.f32 %v711, %v887
        %v896 = vmul.f32 %v712, %v883
        %v897 = vmul.f32 %v713, %v887
        %v898 = vmul.f32 %v714, %v883
        %v899 = vmul.f32 %v715, %v887
        %v900 = vmul.f32 %v716, %v883
        %v901 = vmul.f32 %v717, %v887
        %v902 = vmul.f32 %v718, %v883
        %v903 = vmul.f32 %v719, %v887
        %v904 = vmul.f32 %v720, %v883
        %v905 = vmul.f32 %v721, %v887
        %v906 = vmul.f32 %v722, %v883
        %v907 = vmul.f32 %v723, %v887
        %v908 = vmul.f32 %v724, %v883
        %v909 = vmul.f32 %v725, %v887
        %v910 = vmul.f32 %v726, %v883
        %v911 = vmul.f32 %v727, %v887
        %v912 = vmul.f32 %v728, %v883
        %v913 = vmul.f32 %v729, %v887
        %v914 = vmul.f32 %v730, %v883
        %v915 = vmul.f32 %v731, %v887
        %v916 = vmul.f32 %v732, %v883
        %v917 = vmul.f32 %v733, %v887
        %v918 = vmul.f32 %v734, %v883
        %v919 = vmul.f32 %v735, %v887
        %v920 = vlaneseq
        %v921 = vshrl.u32 %v920, 7
        %v922 = vsub.s32 1, %v921
        %v923 = vrot.slane %v865, %v922
        %v924 = vlaneseq
        %v925 = vshrl.u32 %v924, 7
        %v926 = vsub.s32 5, %v925
        %v927 = vrot.slane %v865, %v926
        %v930 = vlaneseq
        %v931 = vshrl.u32 %v930, 7
        %v932 = vsub.s32 1, %v931
        %v933 = vrot.slane %v923, %v932
        %v934 = vlaneseq
        %v935 = vshrl.u32 %v934, 7
        %v936 = vsub.s32 1, %v935
        %v937 = vrot.slane %v927, %v936
        %v938 = vmul.f32 %v600, %v933
        %v939 = vmul.f32 %v601, %v937
        %v940 = vmul.f32 %v602, %v933
        %v941 = vmul.f32 %v603, %v937
        %v942 = vmul.f32 %v504, %v933
        %v943 = vmul.f32 %v506, %v937
        %v944 = vmul.f32 %v508, %v933
        %v945 = vmul.f32 %v510, %v937
        %v946 = vmul.f32 %v514, %v933
        %v947 = vmul.f32 %v516, %v937
        %v948 = vmul.f32 %v518, %v933
        %v949 = vmul.f32 %v520, %v937
        %v950 = vmul.f32 %v524, %v933
        %v951 = vmul.f32 %v526, %v937
        %v952 = vmul.f32 %v528, %v933
        %v953 = vmul.f32 %v530, %v937
        %v954 = vmul.f32 %v534, %v933
        %v955 = vmul.f32 %v536, %v937
        %v956 = vmul.f32 %v538, %v933
        %v957 = vmul.f32 %v540, %v937
        %v958 = vmul.f32 %v544, %v933
        %v959 = vmul.f32 %v546, %v937
        %v960 = vmul.f32 %v548, %v933
        %v961 = vmul.f32 %v550, %v937
        %v962 = vmul.f32 %v554, %v933
        %v963 = vmul.f32 %v556, %v937
        %v964 = vmul.f32 %v558, %v933
        %v965 = vmul.f32 %v560, %v937
        %v966 = vmul.f32 %v564, %v933
        %v967 = vmul.f32 %v566, %v937
        %v968 = vmul.f32 %v568, %v933
        %v969 = vmul.f32 %v570, %v937
        %v970 = vadd.f32 %v888, %v938
        %v971 = vadd.f32 %v889, %v939
        %v972 = vadd.f32 %v890, %v940
        %v973 = vadd.f32 %v891, %v941
        %v974 = vadd.f32 %v892, %v942
        %v975 = vadd.f32 %v893, %v943
        %v976 = vadd.f32 %v894, %v944
        %v977 = vadd.f32 %v895, %v945
        %v978 = vadd.f32 %v896, %v946
        %v979 = vadd.f32 %v897, %v947
        %v980 = vadd.f32 %v898, %v948
        %v981 = vadd.f32 %v899, %v949
        %v982 = vadd.f32 %v900, %v950
        %v983 = vadd.f32 %v901, %v951
        %v984 = vadd.f32 %v902, %v952
        %v985 = vadd.f32 %v903, %v953
        %v986 = vadd.f32 %v904, %v954
        %v987 = vadd.f32 %v905, %v955
        %v988 = vadd.f32 %v906, %v956
        %v989 = vadd.f32 %v907, %v957
        %v990 = vadd.f32 %v908, %v958
        %v991 = vadd.f32 %v909, %v959
        %v992 = vadd.f32 %v910, %v960
        %v993 = vadd.f32 %v911, %v961
        %v994 = vadd.f32 %v912, %v962
        %v995 = vadd.f32 %v913, %v963
        %v996 = vadd.f32 %v914, %v964
        %v997 = vadd.f32 %v915, %v965
        %v998 = vadd.f32 %v916, %v966
        %v999 = vadd.f32 %v917, %v967
        %v1000 = vadd.f32 %v918, %v968
        %v1001 = vadd.f32 %v919, %v969
        %v1002 = vlaneseq
        %v1003 = vshrl.u32 %v1002, 7
        %v1004 = vsub.s32 2, %v1003
        %v1005 = vrot.slane %v865, %v1004
        %v1006 = vlaneseq
        %v1007 = vshrl.u32 %v1006, 7
        %v1008 = vsub.s32 6, %v1007
        %v1009 = vrot.slane %v865, %v1008
        %v1012 = vlaneseq
        %v1013 = vshrl.u32 %v1012, 7
        %v1014 = vsub.s32 2, %v1013
        %v1015 = vrot.slane %v1005, %v1014
        %v1016 = vlaneseq
        %v1017 = vshrl.u32 %v1016, 7
        %v1018 = vsub.s32 2, %v1017
        %v1019 = vrot.slane %v1009, %v1018
        %v1020 = vmul.f32 %v825, %v1015
        %v1021 = vmul.f32 %v826, %v1019
        %v1022 = vmul.f32 %v827, %v1015
        %v1023 = vmul.f32 %v828, %v1019
        %v1024 = vmul.f32 %v829, %v1015
        %v1025 = vmul.f32 %v830, %v1019
        %v1026 = vmul.f32 %v831, %v1015
        %v1027 = vmul.f32 %v832, %v1019
        %v1028 = vmul.f32 %v833, %v1015
        %v1029 = vmul.f32 %v834, %v1019
        %v1030 = vmul.f32 %v835, %v1015
        %v1031 = vmul.f32 %v836, %v1019
        %v1032 = vmul.f32 %v837, %v1015
        %v1033 = vmul.f32 %v838, %v1019
        %v1034 = vmul.f32 %v839, %v1015
        %v1035 = vmul.f32 %v840, %v1019
        %v1036 = vmul.f32 %v841, %v1015
        %v1037 = vmul.f32 %v842, %v1019
        %v1038 = vmul.f32 %v843, %v1015
        %v1039 = vmul.f32 %v844, %v1019
        %v1040 = vmul.f32 %v845, %v1015
        %v1041 = vmul.f32 %v846, %v1019
        %v1042 = vmul.f32 %v847, %v1015
        %v1043 = vmul.f32 %v848, %v1019
        %v1044 = vmul.f32 %v849, %v1015
        %v1045 = vmul.f32 %v850, %v1019
        %v1046 = vmul.f32 %v851, %v1015
        %v1047 = vmul.f32 %v852, %v1019
        %v1048 = vmul.f32 %v853, %v1015
        %v1049 = vmul.f32 %v854, %v1019
        %v1050 = vmul.f32 %v855, %v1015
        %v1051 = vmul.f32 %v856, %v1019
        %v1052 = vadd.f32 %v970, %v1020
        %v1053 = vadd.f32 %v971, %v1021
        %v1054 = vadd.f32 %v972, %v1022
        %v1055 = vadd.f32 %v973, %v1023
        %v1056 = vadd.f32 %v974, %v1024
        %v1057 = vadd.f32 %v975, %v1025
        %v1058 = vadd.f32 %v976, %v1026
        %v1059 = vadd.f32 %v977, %v1027
        %v1060 = vadd.f32 %v978, %v1028
        %v1061 = vadd.f32 %v979, %v1029
        %v1062 = vadd.f32 %v980, %v1030
        %v1063 = vadd.f32 %v981, %v1031
        %v1064 = vadd.f32 %v982, %v1032
        %v1065 = vadd.f32 %v983, %v1033
        %v1066 = vadd.f32 %v984, %v1034
        %v1067 = vadd.f32 %v985, %v1035
        %v1068 = vadd.f32 %v986, %v1036
        %v1069 = vadd.f32 %v987, %v1037
        %v1070 = vadd.f32 %v988, %v1038
        %v1071 = vadd.f32 %v989, %v1039
        %v1072 = vadd.f32 %v990, %v1040
        %v1073 = vadd.f32 %v991, %v1041
        %v1074 = vadd.f32 %v992, %v1042
        %v1075 = vadd.f32 %v993, %v1043
        %v1076 = vadd.f32 %v994, %v1044
        %v1077 = vadd.f32 %v995, %v1045
        %v1078 = vadd.f32 %v996, %v1046
        %v1079 = vadd.f32 %v997, %v1047
        %v1080 = vadd.f32 %v998, %v1048
        %v1081 = vadd.f32 %v999, %v1049
        %v1082 = vadd.f32 %v1000, %v1050
        %v1083 = vadd.f32 %v1001, %v1051
        %v1085 = vlaneseq
        %v1086 = vshrl.u32 %v1085, 7
        %v1087 = vsub.s32 0, %v1086
        %v1088 = vrot.slane %v866, %v1087
        %v1089 = vlaneseq
        %v1090 = vshrl.u32 %v1089, 7
        %v1091 = vsub.s32 4, %v1090
        %v1092 = vrot.slane %v866, %v1091
        %v1095 = vlaneseq
        %v1096 = vshrl.u32 %v1095, 7
        %v1097 = vsub.s32 0, %v1096
        %v1098 = vrot.slane %v1088, %v1097
        %v1099 = vlaneseq
        %v1100 = vshrl.u32 %v1099, 7
        %v1101 = vsub.s32 0, %v1100
        %v1102 = vrot.slane %v1092, %v1101
        %v1103 = vmul.f32 %v708, %v1098
        %v1104 = vmul.f32 %v709, %v1102
        %v1105 = vmul.f32 %v710, %v1098
        %v1106 = vmul.f32 %v711, %v1102
        %v1107 = vmul.f32 %v712, %v1098
        %v1108 = vmul.f32 %v713, %v1102
        %v1109 = vmul.f32 %v714, %v1098
        %v1110 = vmul.f32 %v715, %v1102
        %v1111 = vmul.f32 %v716, %v1098
        %v1112 = vmul.f32 %v717, %v1102
        %v1113 = vmul.f32 %v718, %v1098
        %v1114 = vmul.f32 %v719, %v1102
        %v1115 = vmul.f32 %v720, %v1098
        %v1116 = vmul.f32 %v721, %v1102
        %v1117 = vmul.f32 %v722, %v1098
        %v1118 = vmul.f32 %v723, %v1102
        %v1119 = vmul.f32 %v724, %v1098
        %v1120 = vmul.f32 %v725, %v1102
        %v1121 = vmul.f32 %v726, %v1098
        %v1122 = vmul.f32 %v727, %v1102
        %v1123 = vmul.f32 %v728, %v1098
        %v1124 = vmul.f32 %v729, %v1102
        %v1125 = vmul.f32 %v730, %v1098
        %v1126 = vmul.f32 %v731, %v1102
        %v1127 = vmul.f32 %v732, %v1098
        %v1128 = vmul.f32 %v733, %v1102
        %v1129 = vmul.f32 %v734, %v1098
        %v1130 = vmul.f32 %v735, %v1102
        %v1131 = vmul.f32 %v736, %v1098
        %v1132 = vmul.f32 %v737, %v1102
        %v1133 = vmul.f32 %v738, %v1098
        %v1134 = vmul.f32 %v739, %v1102
        %v1135 = vlaneseq
        %v1136 = vshrl.u32 %v1135, 7
        %v1137 = vsub.s32 1, %v1136
        %v1138 = vrot.slane %v866, %v1137
        %v1139 = vlaneseq
        %v1140 = vshrl.u32 %v1139, 7
        %v1141 = vsub.s32 5, %v1140
        %v1142 = vrot.slane %v866, %v1141
        %v1145 = vlaneseq
        %v1146 = vshrl.u32 %v1145, 7
        %v1147 = vsub.s32 1, %v1146
        %v1148 = vrot.slane %v1138, %v1147
        %v1149 = vlaneseq
        %v1150 = vshrl.u32 %v1149, 7
        %v1151 = vsub.s32 1, %v1150
        %v1152 = vrot.slane %v1142, %v1151
        %v1153 = vmul.f32 %v504, %v1148
        %v1154 = vmul.f32 %v506, %v1152
        %v1155 = vmul.f32 %v508, %v1148
        %v1156 = vmul.f32 %v510, %v1152
        %v1157 = vmul.f32 %v514, %v1148
        %v1158 = vmul.f32 %v516, %v1152
        %v1159 = vmul.f32 %v518, %v1148
        %v1160 = vmul.f32 %v520, %v1152
        %v1161 = vmul.f32 %v524, %v1148
        %v1162 = vmul.f32 %v526, %v1152
        %v1163 = vmul.f32 %v528, %v1148
        %v1164 = vmul.f32 %v530, %v1152
        %v1165 = vmul.f32 %v534, %v1148
        %v1166 = vmul.f32 %v536, %v1152
        %v1167 = vmul.f32 %v538, %v1148
        %v1168 = vmul.f32 %v540, %v1152
        %v1169 = vmul.f32 %v544, %v1148
        %v1170 = vmul.f32 %v546, %v1152
        %v1171 = vmul.f32 %v548, %v1148
        %v1172 = vmul.f32 %v550, %v1152
        %v1173 = vmul.f32 %v554, %v1148
        %v1174 = vmul.f32 %v556, %v1152
        %v1175 = vmul.f32 %v558, %v1148
        %v1176 = vmul.f32 %v560, %v1152
        %v1177 = vmul.f32 %v564, %v1148
        %v1178 = vmul.f32 %v566, %v1152
        %v1179 = vmul.f32 %v568, %v1148
        %v1180 = vmul.f32 %v570, %v1152
        %v1181 = vmul.f32 %v574, %v1148
        %v1182 = vmul.f32 %v576, %v1152
        %v1183 = vmul.f32 %v578, %v1148
        %v1184 = vmul.f32 %v580, %v1152
        %v1185 = vadd.f32 %v1103, %v1153
        %v1186 = vadd.f32 %v1104, %v1154
        %v1187 = vadd.f32 %v1105, %v1155
        %v1188 = vadd.f32 %v1106, %v1156
        %v1189 = vadd.f32 %v1107, %v1157
        %v1190 = vadd.f32 %v1108, %v1158
        %v1191 = vadd.f32 %v1109, %v1159
        %v1192 = vadd.f32 %v1110, %v1160
        %v1193 = vadd.f32 %v1111, %v1161
        %v1194 = vadd.f32 %v1112, %v1162
        %v1195 = vadd.f32 %v1113, %v1163
        %v1196 = vadd.f32 %v1114, %v1164
        %v1197 = vadd.f32 %v1115, %v1165
        %v1198 = vadd.f32 %v1116, %v1166
        %v1199 = vadd.f32 %v1117, %v1167
        %v1200 = vadd.f32 %v1118, %v1168
        %v1201 = vadd.f32 %v1119, %v1169
        %v1202 = vadd.f32 %v1120, %v1170
        %v1203 = vadd.f32 %v1121, %v1171
        %v1204 = vadd.f32 %v1122, %v1172
        %v1205 = vadd.f32 %v1123, %v1173
        %v1206 = vadd.f32 %v1124, %v1174
        %v1207 = vadd.f32 %v1125, %v1175
        %v1208 = vadd.f32 %v1126, %v1176
        %v1209 = vadd.f32 %v1127, %v1177
        %v1210 = vadd.f32 %v1128, %v1178
        %v1211 = vadd.f32 %v1129, %v1179
        %v1212 = vadd.f32 %v1130, %v1180
        %v1213 = vadd.f32 %v1131, %v1181
        %v1214 = vadd.f32 %v1132, %v1182
        %v1215 = vadd.f32 %v1133, %v1183
        %v1216 = vadd.f32 %v1134, %v1184
        %v1217 = vlaneseq
        %v1218 = vshrl.u32 %v1217, 7
        %v1219 = vsub.s32 2, %v1218
        %v1220 = vrot.slane %v866, %v1219
        %v1221 = vlaneseq
        %v1222 = vshrl.u32 %v1221, 7
        %v1223 = vsub.s32 6, %v1222
        %v1224 = vrot.slane %v866, %v1223
        %v1227 = vlaneseq
        %v1228 = vshrl.u32 %v1227, 7
        %v1229 = vsub.s32 2, %v1228
        %v1230 = vrot.slane %v1220, %v1229
        %v1231 = vlaneseq
        %v1232 = vshrl.u32 %v1231, 7
        %v1233 = vsub.s32 2, %v1232
        %v1234 = vrot.slane %v1224, %v1233
        %v1235 = vmul.f32 %v829, %v1230
        %v1236 = vmul.f32 %v830, %v1234
        %v1237 = vmul.f32 %v831, %v1230
        %v1238 = vmul.f32 %v832, %v1234
        %v1239 = vmul.f32 %v833, %v1230
        %v1240 = vmul.f32 %v834, %v1234
        %v1241 = vmul.f32 %v835, %v1230
        %v1242 = vmul.f32 %v836, %v1234
        %v1243 = vmul.f32 %v837, %v1230
        %v1244 = vmul.f32 %v838, %v1234
        %v1245 = vmul.f32 %v839, %v1230
        %v1246 = vmul.f32 %v840, %v1234
        %v1247 = vmul.f32 %v841, %v1230
        %v1248 = vmul.f32 %v842, %v1234
        %v1249 = vmul.f32 %v843, %v1230
        %v1250 = vmul.f32 %v844, %v1234
        %v1251 = vmul.f32 %v845, %v1230
        %v1252 = vmul.f32 %v846, %v1234
        %v1253 = vmul.f32 %v847, %v1230
        %v1254 = vmul.f32 %v848, %v1234
        %v1255 = vmul.f32 %v849, %v1230
        %v1256 = vmul.f32 %v850, %v1234
        %v1257 = vmul.f32 %v851, %v1230
        %v1258 = vmul.f32 %v852, %v1234
        %v1259 = vmul.f32 %v853, %v1230
        %v1260 = vmul.f32 %v854, %v1234
        %v1261 = vmul.f32 %v855, %v1230
        %v1262 = vmul.f32 %v856, %v1234
        %v1263 = vmul.f32 %v857, %v1230
        %v1264 = vmul.f32 %v858, %v1234
        %v1265 = vmul.f32 %v859, %v1230
        %v1266 = vmul.f32 %v860, %v1234
        %v1267 = vadd.f32 %v1185, %v1235
        %v1268 = vadd.f32 %v1186, %v1236
        %v1269 = vadd.f32 %v1187, %v1237
        %v1270 = vadd.f32 %v1188, %v1238
        %v1271 = vadd.f32 %v1189, %v1239
        %v1272 = vadd.f32 %v1190, %v1240
        %v1273 = vadd.f32 %v1191, %v1241
        %v1274 = vadd.f32 %v1192, %v1242
        %v1275 = vadd.f32 %v1193, %v1243
        %v1276 = vadd.f32 %v1194, %v1244
        %v1277 = vadd.f32 %v1195, %v1245
        %v1278 = vadd.f32 %v1196, %v1246
        %v1279 = vadd.f32 %v1197, %v1247
        %v1280 = vadd.f32 %v1198, %v1248
        %v1281 = vadd.f32 %v1199, %v1249
        %v1282 = vadd.f32 %v1200, %v1250
        %v1283 = vadd.f32 %v1201, %v1251
        %v1284 = vadd.f32 %v1202, %v1252
        %v1285 = vadd.f32 %v1203, %v1253
        %v1286 = vadd.f32 %v1204, %v1254
        %v1287 = vadd.f32 %v1205, %v1255
        %v1288 = vadd.f32 %v1206, %v1256
        %v1289 = vadd.f32 %v1207, %v1257
        %v1290 = vadd.f32 %v1208, %v1258
        %v1291 = vadd.f32 %v1209, %v1259
        %v1292 = vadd.f32 %v1210, %v1260
        %v1293 = vadd.f32 %v1211, %v1261
        %v1294 = vadd.f32 %v1212, %v1262
        %v1295 = vadd.f32 %v1213, %v1263
        %v1296 = vadd.f32 %v1214, %v1264
        %v1297 = vadd.f32 %v1215, %v1265
        %v1298 = vadd.f32 %v1216, %v1266
        %v1299 = vadd.f32 %v1052, %v1267
        %v1300 = vadd.f32 %v1053, %v1268
        %v1301 = vadd.f32 %v1054, %v1269
        %v1302 = vadd.f32 %v1055, %v1270
        %v1303 = vadd.f32 %v1056, %v1271
        %v1304 = vadd.f32 %v1057, %v1272
        %v1305 = vadd.f32 %v1058, %v1273
        %v1306 = vadd.f32 %v1059, %v1274
        %v1307 = vadd.f32 %v1060, %v1275
        %v1308 = vadd.f32 %v1061, %v1276
        %v1309 = vadd.f32 %v1062, %v1277
        %v1310 = vadd.f32 %v1063, %v1278
        %v1311 = vadd.f32 %v1064, %v1279
        %v1312 = vadd.f32 %v1065, %v1280
        %v1313 = vadd.f32 %v1066, %v1281
        %v1314 = vadd.f32 %v1067, %v1282
        %v1315 = vadd.f32 %v1068, %v1283
        %v1316 = vadd.f32 %v1069, %v1284
        %v1317 = vadd.f32 %v1070, %v1285
        %v1318 = vadd.f32 %v1071, %v1286
        %v1319 = vadd.f32 %v1072, %v1287
        %v1320 = vadd.f32 %v1073, %v1288
        %v1321 = vadd.f32 %v1074, %v1289
        %v1322 = vadd.f32 %v1075, %v1290
        %v1323 = vadd.f32 %v1076, %v1291
        %v1324 = vadd.f32 %v1077, %v1292
        %v1325 = vadd.f32 %v1078, %v1293
        %v1326 = vadd.f32 %v1079, %v1294
        %v1327 = vadd.f32 %v1080, %v1295
        %v1328 = vadd.f32 %v1081, %v1296
        %v1329 = vadd.f32 %v1082, %v1297
        %v1330 = vadd.f32 %v1083, %v1298
        %v1332 = vlaneseq
        %v1333 = vshrl.u32 %v1332, 7
        %v1334 = vsub.s32 0, %v1333
        %v1335 = vrot.slane %v867, %v1334
        %v1336 = vlaneseq
        %v1337 = vshrl.u32 %v1336, 7
        %v1338 = vsub.s32 4, %v1337
        %v1339 = vrot.slane %v867, %v1338
        %v1342 = vlaneseq
        %v1343 = vshrl.u32 %v1342, 7
        %v1344 = vsub.s32 0, %v1343
        %v1345 = vrot.slane %v1335, %v1344
        %v1346 = vlaneseq
        %v1347 = vshrl.u32 %v1346, 7
        %v1348 = vsub.s32 0, %v1347
        %v1349 = vrot.slane %v1339, %v1348
        %v1350 = vmul.f32 %v712, %v1345
        %v1351 = vmul.f32 %v713, %v1349
        %v1352 = vmul.f32 %v714, %v1345
        %v1353 = vmul.f32 %v715, %v1349
        %v1354 = vmul.f32 %v716, %v1345
        %v1355 = vmul.f32 %v717, %v1349
        %v1356 = vmul.f32 %v718, %v1345
        %v1357 = vmul.f32 %v719, %v1349
        %v1358 = vmul.f32 %v720, %v1345
        %v1359 = vmul.f32 %v721, %v1349
        %v1360 = vmul.f32 %v722, %v1345
        %v1361 = vmul.f32 %v723, %v1349
        %v1362 = vmul.f32 %v724, %v1345
        %v1363 = vmul.f32 %v725, %v1349
        %v1364 = vmul.f32 %v726, %v1345
        %v1365 = vmul.f32 %v727, %v1349
        %v1366 = vmul.f32 %v728, %v1345
        %v1367 = vmul.f32 %v729, %v1349
        %v1368 = vmul.f32 %v730, %v1345
        %v1369 = vmul.f32 %v731, %v1349
        %v1370 = vmul.f32 %v732, %v1345
        %v1371 = vmul.f32 %v733, %v1349
        %v1372 = vmul.f32 %v734, %v1345
        %v1373 = vmul.f32 %v735, %v1349
        %v1374 = vmul.f32 %v736, %v1345
        %v1375 = vmul.f32 %v737, %v1349
        %v1376 = vmul.f32 %v738, %v1345
        %v1377 = vmul.f32 %v739, %v1349
        %v1378 = vmul.f32 %v740, %v1345
        %v1379 = vmul.f32 %v741, %v1349
        %v1380 = vmul.f32 %v742, %v1345
        %v1381 = vmul.f32 %v743, %v1349
        %v1382 = vlaneseq
        %v1383 = vshrl.u32 %v1382, 7
        %v1384 = vsub.s32 1, %v1383
        %v1385 = vrot.slane %v867, %v1384
        %v1386 = vlaneseq
        %v1387 = vshrl.u32 %v1386, 7
        %v1388 = vsub.s32 5, %v1387
        %v1389 = vrot.slane %v867, %v1388
        %v1392 = vlaneseq
        %v1393 = vshrl.u32 %v1392, 7
        %v1394 = vsub.s32 1, %v1393
        %v1395 = vrot.slane %v1385, %v1394
        %v1396 = vlaneseq
        %v1397 = vshrl.u32 %v1396, 7
        %v1398 = vsub.s32 1, %v1397
        %v1399 = vrot.slane %v1389, %v1398
        %v1400 = vmul.f32 %v514, %v1395
        %v1401 = vmul.f32 %v516, %v1399
        %v1402 = vmul.f32 %v518, %v1395
        %v1403 = vmul.f32 %v520, %v1399
        %v1404 = vmul.f32 %v524, %v1395
        %v1405 = vmul.f32 %v526, %v1399
        %v1406 = vmul.f32 %v528, %v1395
        %v1407 = vmul.f32 %v530, %v1399
        %v1408 = vmul.f32 %v534, %v1395
        %v1409 = vmul.f32 %v536, %v1399
        %v1410 = vmul.f32 %v538, %v1395
        %v1411 = vmul.f32 %v540, %v1399
        %v1412 = vmul.f32 %v544, %v1395
        %v1413 = vmul.f32 %v546, %v1399
        %v1414 = vmul.f32 %v548, %v1395
        %v1415 = vmul.f32 %v550, %v1399
        %v1416 = vmul.f32 %v554, %v1395
        %v1417 = vmul.f32 %v556, %v1399
        %v1418 = vmul.f32 %v558, %v1395
        %v1419 = vmul.f32 %v560, %v1399
        %v1420 = vmul.f32 %v564, %v1395
        %v1421 = vmul.f32 %v566, %v1399
        %v1422 = vmul.f32 %v568, %v1395
        %v1423 = vmul.f32 %v570, %v1399
        %v1424 = vmul.f32 %v574, %v1395
        %v1425 = vmul.f32 %v576, %v1399
        %v1426 = vmul.f32 %v578, %v1395
        %v1427 = vmul.f32 %v580, %v1399
        %v1428 = vmul.f32 %v604, %v1395
        %v1429 = vmul.f32 %v605, %v1399
        %v1430 = vmul.f32 %v606, %v1395
        %v1431 = vmul.f32 %v607, %v1399
        %v1432 = vadd.f32 %v1350, %v1400
        %v1433 = vadd.f32 %v1351, %v1401
        %v1434 = vadd.f32 %v1352, %v1402
        %v1435 = vadd.f32 %v1353, %v1403
        %v1436 = vadd.f32 %v1354, %v1404
        %v1437 = vadd.f32 %v1355, %v1405
        %v1438 = vadd.f32 %v1356, %v1406
        %v1439 = vadd.f32 %v1357, %v1407
        %v1440 = vadd.f32 %v1358, %v1408
        %v1441 = vadd.f32 %v1359, %v1409
        %v1442 = vadd.f32 %v1360, %v1410
        %v1443 = vadd.f32 %v1361, %v1411
        %v1444 = vadd.f32 %v1362, %v1412
        %v1445 = vadd.f32 %v1363, %v1413
        %v1446 = vadd.f32 %v1364, %v1414
        %v1447 = vadd.f32 %v1365, %v1415
        %v1448 = vadd.f32 %v1366, %v1416
        %v1449 = vadd.f32 %v1367, %v1417
        %v1450 = vadd.f32 %v1368, %v1418
        %v1451 = vadd.f32 %v1369, %v1419
        %v1452 = vadd.f32 %v1370, %v1420
        %v1453 = vadd.f32 %v1371, %v1421
        %v1454 = vadd.f32 %v1372, %v1422
        %v1455 = vadd.f32 %v1373, %v1423
        %v1456 = vadd.f32 %v1374, %v1424
        %v1457 = vadd.f32 %v1375, %v1425
        %v1458 = vadd.f32 %v1376, %v1426
        %v1459 = vadd.f32 %v1377, %v1427
        %v1460 = vadd.f32 %v1378, %v1428
        %v1461 = vadd.f32 %v1379, %v1429
        %v1462 = vadd.f32 %v1380, %v1430
        %v1463 = vadd.f32 %v1381, %v1431
        %v1464 = vlaneseq
        %v1465 = vshrl.u32 %v1464, 7
        %v1466 = vsub.s32 2, %v1465
        %v1467 = vrot.slane %v867, %v1466
        %v1468 = vlaneseq
        %v1469 = vshrl.u32 %v1468, 7
        %v1470 = vsub.s32 6, %v1469
        %v1471 = vrot.slane %v867, %v1470
        %v1474 = vlaneseq
        %v1475 = vshrl.u32 %v1474, 7
        %v1476 = vsub.s32 2, %v1475
        %v1477 = vrot.slane %v1467, %v1476
        %v1478 = vlaneseq
        %v1479 = vshrl.u32 %v1478, 7
        %v1480 = vsub.s32 2, %v1479
        %v1481 = vrot.slane %v1471, %v1480
        %v1482 = vmul.f32 %v833, %v1477
        %v1483 = vmul.f32 %v834, %v1481
        %v1484 = vmul.f32 %v835, %v1477
        %v1485 = vmul.f32 %v836, %v1481
        %v1486 = vmul.f32 %v837, %v1477
        %v1487 = vmul.f32 %v838, %v1481
        %v1488 = vmul.f32 %v839, %v1477
        %v1489 = vmul.f32 %v840, %v1481
        %v1490 = vmul.f32 %v841, %v1477
        %v1491 = vmul.f32 %v842, %v1481
        %v1492 = vmul.f32 %v843, %v1477
        %v1493 = vmul.f32 %v844, %v1481
        %v1494 = vmul.f32 %v845, %v1477
        %v1495 = vmul.f32 %v846, %v1481
        %v1496 = vmul.f32 %v847, %v1477
        %v1497 = vmul.f32 %v848, %v1481
        %v1498 = vmul.f32 %v849, %v1477
        %v1499 = vmul.f32 %v850, %v1481
        %v1500 = vmul.f32 %v851, %v1477
        %v1501 = vmul.f32 %v852, %v1481
        %v1502 = vmul.f32 %v853, %v1477
        %v1503 = vmul.f32 %v854, %v1481
        %v1504 = vmul.f32 %v855, %v1477
        %v1505 = vmul.f32 %v856, %v1481
        %v1506 = vmul.f32 %v857, %v1477
        %v1507 = vmul.f32 %v858, %v1481
        %v1508 = vmul.f32 %v859, %v1477
        %v1509 = vmul.f32 %v860, %v1481
        %v1510 = vmul.f32 %v861, %v1477
        %v1511 = vmul.f32 %v862, %v1481
        %v1512 = vmul.f32 %v863, %v1477
        %v1513 = vmul.f32 %v864, %v1481
        %v1514 = vadd.f32 %v1432, %v1482
        %v1515 = vadd.f32 %v1433, %v1483
        %v1516 = vadd.f32 %v1434, %v1484
        %v1517 = vadd.f32 %v1435, %v1485
        %v1518 = vadd.f32 %v1436, %v1486
        %v1519 = vadd.f32 %v1437, %v1487
        %v1520 = vadd.f32 %v1438, %v1488
        %v1521 = vadd.f32 %v1439, %v1489
        %v1522 = vadd.f32 %v1440, %v1490
        %v1523 = vadd.f32 %v1441, %v1491
        %v1524 = vadd.f32 %v1442, %v1492
        %v1525 = vadd.f32 %v1443, %v1493
        %v1526 = vadd.f32 %v1444, %v1494
        %v1527 = vadd.f32 %v1445, %v1495
        %v1528 = vadd.f32 %v1446, %v1496
        %v1529 = vadd.f32 %v1447, %v1497
        %v1530 = vadd.f32 %v1448, %v1498
        %v1531 = vadd.f32 %v1449, %v1499
        %v1532 = vadd.f32 %v1450, %v1500
        %v1533 = vadd.f32 %v1451, %v1501
        %v1534 = vadd.f32 %v1452, %v1502
        %v1535 = vadd.f32 %v1453, %v1503
        %v1536 = vadd.f32 %v1454, %v1504
        %v1537 = vadd.f32 %v1455, %v1505
        %v1538 = vadd.f32 %v1456, %v1506
        %v1539 = vadd.f32 %v1457, %v1507
        %v1540 = vadd.f32 %v1458, %v1508
        %v1541 = vadd.f32 %v1459, %v1509
        %v1542 = vadd.f32 %v1460, %v1510
        %v1543 = vadd.f32 %v1461, %v1511
        %v1544 = vadd.f32 %v1462, %v1512
        %v1545 = vadd.f32 %v1463, %v1513
        %v1546 = vadd.f32 %v1299, %v1514
        %v1547 = vadd.f32 %v1300, %v1515
        %v1548 = vadd.f32 %v1301, %v1516
        %v1549 = vadd.f32 %v1302, %v1517
        %v1550 = vadd.f32 %v1303, %v1518
        %v1551 = vadd.f32 %v1304, %v1519
        %v1552 = vadd.f32 %v1305, %v1520
        %v1553 = vadd.f32 %v1306, %v1521
        %v1554 = vadd.f32 %v1307, %v1522
        %v1555 = vadd.f32 %v1308, %v1523
        %v1556 = vadd.f32 %v1309, %v1524
        %v1557 = vadd.f32 %v1310, %v1525
        %v1558 = vadd.f32 %v1311, %v1526
        %v1559 = vadd.f32 %v1312, %v1527
        %v1560 = vadd.f32 %v1313, %v1528
        %v1561 = vadd.f32 %v1314, %v1529
        %v1562 = vadd.f32 %v1315, %v1530
        %v1563 = vadd.f32 %v1316, %v1531
        %v1564 = vadd.f32 %v1317, %v1532
        %v1565 = vadd.f32 %v1318, %v1533
        %v1566 = vadd.f32 %v1319, %v1534
        %v1567 = vadd.f32 %v1320, %v1535
        %v1568 = vadd.f32 %v1321, %v1536
        %v1569 = vadd.f32 %v1322, %v1537
        %v1570 = vadd.f32 %v1323, %v1538
        %v1571 = vadd.f32 %v1324, %v1539
        %v1572 = vadd.f32 %v1325, %v1540
        %v1573 = vadd.f32 %v1326, %v1541
        %v1574 = vadd.f32 %v1327, %v1542
        %v1575 = vadd.f32 %v1328, %v1543
        %v1576 = vadd.f32 %v1329, %v1544
        %v1577 = vadd.f32 %v1330, %v1545
        %v1579 = vlaneseq
        %v1580 = vshrl.u32 %v1579, 7
        %v1581 = vsub.s32 0, %v1580
        %v1582 = vrot.slane %v868, %v1581
        %v1583 = vlaneseq
        %v1584 = vshrl.u32 %v1583, 7
        %v1585 = vsub.s32 1, %v1584
        %v1586 = vrot.slane %v868, %v1585
        %v1589 = vadd.f32 %v1546, %v1582
        %v1590 = vadd.f32 %v1547, %v1586
        %v1591 = vadd.f32 %v1548, %v1582
        %v1592 = vadd.f32 %v1549, %v1586
        %v1593 = vadd.f32 %v1550, %v1582
        %v1594 = vadd.f32 %v1551, %v1586
        %v1595 = vadd.f32 %v1552, %v1582
        %v1596 = vadd.f32 %v1553, %v1586
        %v1597 = vadd.f32 %v1554, %v1582
        %v1598 = vadd.f32 %v1555, %v1586
        %v1599 = vadd.f32 %v1556, %v1582
        %v1600 = vadd.f32 %v1557, %v1586
        %v1601 = vadd.f32 %v1558, %v1582
        %v1602 = vadd.f32 %v1559, %v1586
        %v1603 = vadd.f32 %v1560, %v1582
        %v1604 = vadd.f32 %v1561, %v1586
        %v1605 = vadd.f32 %v1562, %v1582
        %v1606 = vadd.f32 %v1563, %v1586
        %v1607 = vadd.f32 %v1564, %v1582
        %v1608 = vadd.f32 %v1565, %v1586
        %v1609 = vadd.f32 %v1566, %v1582
        %v1610 = vadd.f32 %v1567, %v1586
        %v1611 = vadd.f32 %v1568, %v1582
        %v1612 = vadd.f32 %v1569, %v1586
        %v1613 = vadd.f32 %v1570, %v1582
        %v1614 = vadd.f32 %v1571, %v1586
        %v1615 = vadd.f32 %v1572, %v1582
        %v1616 = vadd.f32 %v1573, %v1586
        %v1617 = vadd.f32 %v1574, %v1582
        %v1618 = vadd.f32 %v1575, %v1586
        %v1619 = vadd.f32 %v1576, %v1582
        %v1620 = vadd.f32 %v1577, %v1586
        %v1621 = vmul.f32 %v1589, %v1589
        %v1622 = vmul.f32 %v1591, %v1591
        %v1623 = vmul.f32 %v1593, %v1593
        %v1624 = vmul.f32 %v1595, %v1595
        %v1625 = vmul.f32 %v1597, %v1597
        %v1626 = vmul.f32 %v1599, %v1599
        %v1627 = vmul.f32 %v1601, %v1601
        %v1628 = vmul.f32 %v1603, %v1603
        %v1629 = vmul.f32 %v1605, %v1605
        %v1630 = vmul.f32 %v1607, %v1607
        %v1631 = vmul.f32 %v1609, %v1609
        %v1632 = vmul.f32 %v1611, %v1611
        %v1633 = vmul.f32 %v1613, %v1613
        %v1634 = vmul.f32 %v1615, %v1615
        %v1635 = vmul.f32 %v1617, %v1617
        %v1636 = vmul.f32 %v1619, %v1619
        %v1637 = vmul.f32 %v1589, %v1621
        %v1638 = vmul.f32 %v1591, %v1622
        %v1639 = vmul.f32 %v1593, %v1623
        %v1640 = vmul.f32 %v1595, %v1624
        %v1641 = vmul.f32 %v1597, %v1625
        %v1642 = vmul.f32 %v1599, %v1626
        %v1643 = vmul.f32 %v1601, %v1627
        %v1644 = vmul.f32 %v1603, %v1628
        %v1645 = vmul.f32 %v1605, %v1629
        %v1646 = vmul.f32 %v1607, %v1630
        %v1647 = vmul.f32 %v1609, %v1631
        %v1648 = vmul.f32 %v1611, %v1632
        %v1649 = vmul.f32 %v1613, %v1633
        %v1650 = vmul.f32 %v1615, %v1634
        %v1651 = vmul.f32 %v1617, %v1635
        %v1652 = vmul.f32 %v1619, %v1636
        %v1653 = vmul.f32 %v1637, 0.044715
        %v1654 = vmul.f32 %v1638, 0.044715
        %v1655 = vmul.f32 %v1639, 0.044715
        %v1656 = vmul.f32 %v1640, 0.044715
        %v1657 = vmul.f32 %v1641, 0.044715
        %v1658 = vmul.f32 %v1642, 0.044715
        %v1659 = vmul.f32 %v1643, 0.044715
        %v1660 = vmul.f32 %v1644, 0.044715
        %v1661 = vmul.f32 %v1645, 0.044715
        %v1662 = vmul.f32 %v1646, 0.044715
        %v1663 = vmul.f32 %v1647, 0.044715
        %v1664 = vmul.f32 %v1648, 0.044715
        %v1665 = vmul.f32 %v1649, 0.044715
        %v1666 = vmul.f32 %v1650, 0.044715
        %v1667 = vmul.f32 %v1651, 0.044715
        %v1668 = vmul.f32 %v1652, 0.044715
        %v1669 = vadd.f32 %v1589, %v1653
        %v1670 = vadd.f32 %v1591, %v1654
        %v1671 = vadd.f32 %v1593, %v1655
        %v1672 = vadd.f32 %v1595, %v1656
        %v1673 = vadd.f32 %v1597, %v1657
        %v1674 = vadd.f32 %v1599, %v1658
        %v1675 = vadd.f32 %v1601, %v1659
        %v1676 = vadd.f32 %v1603, %v1660
        %v1677 = vadd.f32 %v1605, %v1661
        %v1678 = vadd.f32 %v1607, %v1662
        %v1679 = vadd.f32 %v1609, %v1663
        %v1680 = vadd.f32 %v1611, %v1664
        %v1681 = vadd.f32 %v1613, %v1665
        %v1682 = vadd.f32 %v1615, %v1666
        %v1683 = vadd.f32 %v1617, %v1667
        %v1684 = vadd.f32 %v1619, %v1668
        %v1685 = vmul.f32 %v1669, 0.7978846
        %v1686 = vmul.f32 %v1670, 0.7978846
        %v1687 = vmul.f32 %v1671, 0.7978846
        %v1688 = vmul.f32 %v1672, 0.7978846
        %v1689 = vmul.f32 %v1673, 0.7978846
        %v1690 = vmul.f32 %v1674, 0.7978846
        %v1691 = vmul.f32 %v1675, 0.7978846
        %v1692 = vmul.f32 %v1676, 0.7978846
        %v1693 = vmul.f32 %v1677, 0.7978846
        %v1694 = vmul.f32 %v1678, 0.7978846
        %v1695 = vmul.f32 %v1679, 0.7978846
        %v1696 = vmul.f32 %v1680, 0.7978846
        %v1697 = vmul.f32 %v1681, 0.7978846
        %v1698 = vmul.f32 %v1682, 0.7978846
        %v1699 = vmul.f32 %v1683, 0.7978846
        %v1700 = vmul.f32 %v1684, 0.7978846
        %v1701 = vtanh.pop %v1685
        %v1702 = vtanh.pop %v1686
        %v1703 = vtanh.pop %v1687
        %v1704 = vtanh.pop %v1688
        %v1705 = vtanh.pop %v1689
        %v1706 = vtanh.pop %v1690
        %v1707 = vtanh.pop %v1691
        %v1708 = vtanh.pop %v1692
        %v1709 = vtanh.pop %v1693
        %v1710 = vtanh.pop %v1694
        %v1711 = vtanh.pop %v1695
        %v1712 = vtanh.pop %v1696
        %v1713 = vtanh.pop %v1697
        %v1714 = vtanh.pop %v1698
        %v1715 = vtanh.pop %v1699
        %v1716 = vtanh.pop %v1700
        %v1717 = vadd.f32 %v1701, 1.0
        %v1718 = vadd.f32 %v1702, 1.0
        %v1719 = vadd.f32 %v1703, 1.0
        %v1720 = vadd.f32 %v1704, 1.0
        %v1721 = vadd.f32 %v1705, 1.0
        %v1722 = vadd.f32 %v1706, 1.0
        %v1723 = vadd.f32 %v1707, 1.0
        %v1724 = vadd.f32 %v1708, 1.0
        %v1725 = vadd.f32 %v1709, 1.0
        %v1726 = vadd.f32 %v1710, 1.0
        %v1727 = vadd.f32 %v1711, 1.0
        %v1728 = vadd.f32 %v1712, 1.0
        %v1729 = vadd.f32 %v1713, 1.0
        %v1730 = vadd.f32 %v1714, 1.0
        %v1731 = vadd.f32 %v1715, 1.0
        %v1732 = vadd.f32 %v1716, 1.0
        %v1733 = vmul.f32 %v1717, 0.5
        %v1734 = vmul.f32 %v1718, 0.5
        %v1735 = vmul.f32 %v1719, 0.5
        %v1736 = vmul.f32 %v1720, 0.5
        %v1737 = vmul.f32 %v1721, 0.5
        %v1738 = vmul.f32 %v1722, 0.5
        %v1739 = vmul.f32 %v1723, 0.5
        %v1740 = vmul.f32 %v1724, 0.5
        %v1741 = vmul.f32 %v1725, 0.5
        %v1742 = vmul.f32 %v1726, 0.5
        %v1743 = vmul.f32 %v1727, 0.5
        %v1744 = vmul.f32 %v1728, 0.5
        %v1745 = vmul.f32 %v1729, 0.5
        %v1746 = vmul.f32 %v1730, 0.5
        %v1747 = vmul.f32 %v1731, 0.5
        %v1748 = vmul.f32 %v1732, 0.5
        %v1749 = vmul.f32 %v1589, %v1733
        %v1750 = vmul.f32 %v1591, %v1734
        %v1751 = vmul.f32 %v1593, %v1735
        %v1752 = vmul.f32 %v1595, %v1736
        %v1753 = vmul.f32 %v1597, %v1737
        %v1754 = vmul.f32 %v1599, %v1738
        %v1755 = vmul.f32 %v1601, %v1739
        %v1756 = vmul.f32 %v1603, %v1740
        %v1757 = vmul.f32 %v1605, %v1741
        %v1758 = vmul.f32 %v1607, %v1742
        %v1759 = vmul.f32 %v1609, %v1743
        %v1760 = vmul.f32 %v1611, %v1744
        %v1761 = vmul.f32 %v1613, %v1745
        %v1762 = vmul.f32 %v1615, %v1746
        %v1763 = vmul.f32 %v1617, %v1747
        %v1764 = vmul.f32 %v1619, %v1748
        %v1765 = vmul.f32 %v1749, %v1590
        %v1766 = vmul.f32 %v1750, %v1592
        %v1767 = vmul.f32 %v1751, %v1594
        %v1768 = vmul.f32 %v1752, %v1596
        %v1769 = vmul.f32 %v1753, %v1598
        %v1770 = vmul.f32 %v1754, %v1600
        %v1771 = vmul.f32 %v1755, %v1602
        %v1772 = vmul.f32 %v1756, %v1604
        %v1773 = vmul.f32 %v1757, %v1606
        %v1774 = vmul.f32 %v1758, %v1608
        %v1775 = vmul.f32 %v1759, %v1610
        %v1776 = vmul.f32 %v1760, %v1612
        %v1777 = vmul.f32 %v1761, %v1614
        %v1778 = vmul.f32 %v1762, %v1616
        %v1779 = vmul.f32 %v1763, %v1618
        %v1780 = vmul.f32 %v1764, %v1620
        %v1781 = vpack.c.bf16 %v1766, %v1765
        %v1782 = vpack.c.bf16 %v1768, %v1767
        %v1783 = vpack.c.bf16 %v1770, %v1769
        %v1784 = vpack.c.bf16 %v1772, %v1771
        %v1785 = vpack.c.bf16 %v1774, %v1773
        %v1786 = vpack.c.bf16 %v1776, %v1775
        %v1787 = vpack.c.bf16 %v1778, %v1777
        %v1788 = vpack.c.bf16 %v1780, %v1779
        %v1789 = vld [vmem:[%s5] sm:$0xf]
        %v1790 = vld [vmem:[%s5 + $0x4] sm:$0xf]
        %v1791 = vld [vmem:[%s5 + $0x8] sm:$0xf]
        %v1792 = vld [vmem:[%s5 + $0xc] sm:$0xf]
        %v1793 = vld [vmem:[%s5 + $0x10] sm:$0xf]
        %v1794 = vld [vmem:[%s5 + $0x14] sm:$0xf]
        %v1795 = vld [vmem:[%s5 + $0x18] sm:$0xf]
        %v1796 = vld [vmem:[%s5 + $0x1c] sm:$0xf]
        %v1797 = vld [vmem:[%s5 + $0x20] sm:$0xf]
        %v1798 = vld [vmem:[%s5 + $0x24] sm:$0xf]
        %v1799 = vld [vmem:[%s5 + $0x28] sm:$0xf]
        %v1800 = vld [vmem:[%s5 + $0x2c] sm:$0xf]
        %v1801 = vld [vmem:[%s5 + $0x30] sm:$0xf]
        %v1802 = vld [vmem:[%s5 + $0x34] sm:$0xf]
        %v1803 = vld [vmem:[%s5 + $0x38] sm:$0xf]
        %v1804 = vld [vmem:[%s5 + $0x3c] sm:$0xf]
        %v1805 = vld [vmem:[%s6] sm:$0x1]
        %v1807 = vlaneseq
        %v1808 = vshrl.u32 %v1807, 7
        %v1809 = vsub.s32 0, %v1808
        %v1810 = vrot.slane %v1805, %v1809
        %v1828 = vunpack.c.l.b16 %v1789
        %v1829 = vunpack.c.l.b16 %v1790
        %v1830 = vunpack.c.l.b16 %v1791
        %v1831 = vunpack.c.l.b16 %v1792
        %v1832 = vunpack.c.l.b16 %v1793
        %v1833 = vunpack.c.l.b16 %v1794
        %v1834 = vunpack.c.l.b16 %v1795
        %v1835 = vunpack.c.l.b16 %v1796
        %v1836 = vunpack.c.l.b16 %v1797
        %v1837 = vunpack.c.l.b16 %v1798
        %v1838 = vunpack.c.l.b16 %v1799
        %v1839 = vunpack.c.l.b16 %v1800
        %v1840 = vunpack.c.l.b16 %v1801
        %v1841 = vunpack.c.l.b16 %v1802
        %v1842 = vunpack.c.l.b16 %v1803
        %v1843 = vunpack.c.l.b16 %v1804
        %v1844 = vpack.c.b16 %v1829, %v1828
        %v1845 = vpack.c.b16 %v1831, %v1830
        %v1846 = vpack.c.b16 %v1833, %v1832
        %v1847 = vpack.c.b16 %v1835, %v1834
        %v1848 = vpack.c.b16 %v1837, %v1836
        %v1849 = vpack.c.b16 %v1839, %v1838
        %v1850 = vpack.c.b16 %v1841, %v1840
        %v1851 = vpack.c.b16 %v1843, %v1842
        %1860 = vmatprep.subr.bf16.mxu0 0
        %1861 = vmatpush1.bf16.msra.mxu0 %v1844
        %1862 = vmatprep.subr.bf16.mxu0 0
        %1863 = vmatpush1.bf16.msra.mxu0 %v1845
        %1864 = vmatprep.subr.bf16.mxu0 0
        %1865 = vmatpush1.bf16.msra.mxu0 %v1846
        %1866 = vmatprep.subr.bf16.mxu0 0
        %1867 = vmatpush1.bf16.msra.mxu0 %v1847
        %1868 = vmatprep.subr.bf16.mxu0 0
        %1869 = vmatpush1.bf16.msra.mxu0 %v1848
        %1870 = vmatprep.subr.bf16.mxu0 0
        %1871 = vmatpush1.bf16.msra.mxu0 %v1849
        %1872 = vmatprep.subr.bf16.mxu0 0
        %1873 = vmatpush1.bf16.msra.mxu0 %v1850
        %1874 = vmatprep.subr.bf16.mxu0 0
        %1875 = vmatpush1.bf16.msra.mxu0 %v1851
        %1876 = vmatprep.subr.bf16.mxu0 0
        %1877 = vmatpush1.bf16.msra.mxu0 0
        %1878 = vmatprep.subr.bf16.mxu0 0
        %1879 = vmatpush1.bf16.msra.mxu0 0
        %1880 = vmatprep.subr.bf16.mxu0 0
        %1881 = vmatpush1.bf16.msra.mxu0 0
        %1882 = vmatprep.subr.bf16.mxu0 0
        %1883 = vmatpush1.bf16.msra.mxu0 0
        %1884 = vmatprep.subr.bf16.mxu0 0
        %1885 = vmatpush1.bf16.msra.mxu0 0
        %1886 = vmatprep.subr.bf16.mxu0 0
        %1887 = vmatpush1.bf16.msra.mxu0 0
        %1888 = vmatprep.subr.bf16.mxu0 0
        %1889 = vmatpush1.bf16.msra.mxu0 0
        %1890 = vmatprep.subr.bf16.mxu0 0
        %1891 = vmatpush1.bf16.msra.mxu0 0
        %1892 = vmatprep.mubr.bf16.mxu0 0
        %1893 = vmatmul.mubr.bf16.gmra.mrb[0].mxu0 %v1781
        %v1894 = vpop.f32.mrb[0].mxu0
        %v1895 = vadd.f32 %v1810, %v1894
        %v1896 = vpop.f32.mrb[0].mxu0
        %v1897 = vpop.f32.mrb[0].mxu0
        %v1898 = vadd.f32 %v1810, %v1897
        %v1899 = vpop.f32.mrb[0].mxu0
        %1900 = vmatprep.mubr.bf16.mxu0 0
        %1901 = vmatmul.mubr.bf16.gmra.mrb[0].mxu0 %v1782
        %v1902 = vpop.f32.mrb[0].mxu0
        %v1903 = vadd.f32 %v1810, %v1902
        %v1904 = vpop.f32.mrb[0].mxu0
        %v1905 = vpop.f32.mrb[0].mxu0
        %v1906 = vadd.f32 %v1810, %v1905
        %v1907 = vpop.f32.mrb[0].mxu0
        %1908 = vmatprep.mubr.bf16.mxu0 0
        %1909 = vmatmul.mubr.bf16.gmra.mrb[0].mxu0 %v1783
        %v1910 = vpop.f32.mrb[0].mxu0
        %v1911 = vadd.f32 %v1810, %v1910
        %v1912 = vpop.f32.mrb[0].mxu0
        %v1913 = vpop.f32.mrb[0].mxu0
        %v1914 = vadd.f32 %v1810, %v1913
        %v1915 = vpop.f32.mrb[0].mxu0
        %1916 = vmatprep.mubr.bf16.mxu0 0
        %1917 = vmatmul.mubr.bf16.gmra.mrb[0].mxu0 %v1784
        %v1918 = vpop.f32.mrb[0].mxu0
        %v1919 = vadd.f32 %v1810, %v1918
        %v1920 = vpop.f32.mrb[0].mxu0
        %v1921 = vpop.f32.mrb[0].mxu0
        %v1922 = vadd.f32 %v1810, %v1921
        %v1923 = vpop.f32.mrb[0].mxu0
        %1924 = vmatprep.mubr.bf16.mxu0 0
        %1925 = vmatmul.mubr.bf16.gmra.mrb[0].mxu0 %v1785
        %v1926 = vpop.f32.mrb[0].mxu0
        %v1927 = vadd.f32 %v1810, %v1926
        %v1928 = vpop.f32.mrb[0].mxu0
        %v1929 = vpop.f32.mrb[0].mxu0
        %v1930 = vadd.f32 %v1810, %v1929
        %v1931 = vpop.f32.mrb[0].mxu0
        %1932 = vmatprep.mubr.bf16.mxu0 0
        %1933 = vmatmul.mubr.bf16.gmra.mrb[0].mxu0 %v1786
        %v1934 = vpop.f32.mrb[0].mxu0
        %v1935 = vadd.f32 %v1810, %v1934
        %v1936 = vpop.f32.mrb[0].mxu0
        %v1937 = vpop.f32.mrb[0].mxu0
        %v1938 = vadd.f32 %v1810, %v1937
        %v1939 = vpop.f32.mrb[0].mxu0
        %1940 = vmatprep.mubr.bf16.mxu0 0
        %1941 = vmatmul.mubr.bf16.gmra.mrb[0].mxu0 %v1787
        %v1942 = vpop.f32.mrb[0].mxu0
        %v1943 = vadd.f32 %v1810, %v1942
        %v1944 = vpop.f32.mrb[0].mxu0
        %v1945 = vpop.f32.mrb[0].mxu0
        %v1946 = vadd.f32 %v1810, %v1945
        %v1947 = vpop.f32.mrb[0].mxu0
        %1948 = vmatprep.mubr.bf16.mxu0 0
        %1949 = vmatmul.mubr.bf16.gmra.mrb[0].mxu0 %v1788
        %v1950 = vpop.f32.mrb[0].mxu0
        %v1951 = vadd.f32 %v1810, %v1950
        %v1952 = vpop.f32.mrb[0].mxu0
        %v1953 = vpop.f32.mrb[0].mxu0
        %v1954 = vadd.f32 %v1810, %v1953
        %v1955 = vpop.f32.mrb[0].mxu0
        %1956 = vdwg.mxu0
        %v1957 = vadd.f32 %v328, %v1895
        %v1958 = vadd.f32 %v329, %v1898
        %v1959 = vadd.f32 %v330, %v1903
        %v1960 = vadd.f32 %v331, %v1906
        %v1961 = vadd.f32 %v332, %v1911
        %v1962 = vadd.f32 %v333, %v1914
        %v1963 = vadd.f32 %v334, %v1919
        %v1964 = vadd.f32 %v335, %v1922
        %v1965 = vadd.f32 %v336, %v1927
        %v1966 = vadd.f32 %v337, %v1930
        %v1967 = vadd.f32 %v338, %v1935
        %v1968 = vadd.f32 %v339, %v1938
        %v1969 = vadd.f32 %v340, %v1943
        %v1970 = vadd.f32 %v341, %v1946
        %v1971 = vadd.f32 %v342, %v1951
        %v1972 = vadd.f32 %v343, %v1954
        %v1973 = vmax.f32 %v1957, 0.0
        %v1974 = vmax.f32 %v1958, 0.0
        %v1975 = vmax.f32 %v1959, 0.0
        %v1976 = vmax.f32 %v1960, 0.0
        %v1977 = vmax.f32 %v1961, 0.0
        %v1978 = vmax.f32 %v1962, 0.0
        %v1979 = vmax.f32 %v1963, 0.0
        %v1980 = vmax.f32 %v1964, 0.0
        %v1981 = vmax.f32 %v1965, 0.0
        %v1982 = vmax.f32 %v1966, 0.0
        %v1983 = vmax.f32 %v1967, 0.0
        %v1984 = vmax.f32 %v1968, 0.0
        %v1985 = vmax.f32 %v1969, 0.0
        %v1986 = vmax.f32 %v1970, 0.0
        %v1987 = vmax.f32 %v1971, 0.0
        %v1988 = vmax.f32 %v1972, 0.0
        %v1989 = vmin.f32 %v1973, 255.0
        %v1990 = vmin.f32 %v1974, 255.0
        %v1991 = vmin.f32 %v1975, 255.0
        %v1992 = vmin.f32 %v1976, 255.0
        %v1993 = vmin.f32 %v1977, 255.0
        %v1994 = vmin.f32 %v1978, 255.0
        %v1995 = vmin.f32 %v1979, 255.0
        %v1996 = vmin.f32 %v1980, 255.0
        %v1997 = vmin.f32 %v1981, 255.0
        %v1998 = vmin.f32 %v1982, 255.0
        %v1999 = vmin.f32 %v1983, 255.0
        %v2000 = vmin.f32 %v1984, 255.0
        %v2001 = vmin.f32 %v1985, 255.0
        %v2002 = vmin.f32 %v1986, 255.0
        %v2003 = vmin.f32 %v1987, 255.0
        %v2004 = vmin.f32 %v1988, 255.0
        %2021 = vrot.lane.b32.xlu0 %v1989, 64
        %v2022 = vpop.permute.xlu0 %2021
        %2023 = vrot.lane.b32.xlu0 %v1990, 64
        %v2024 = vpop.permute.xlu0 %2023
        %2025 = vrot.lane.b32.xlu0 %v1991, 64
        %v2026 = vpop.permute.xlu0 %2025
        %2027 = vrot.lane.b32.xlu0 %v1992, 64
        %v2028 = vpop.permute.xlu0 %2027
        %2029 = vrot.lane.b32.xlu0 %v1993, 64
        %v2030 = vpop.permute.xlu0 %2029
        %2031 = vrot.lane.b32.xlu0 %v1994, 64
        %v2032 = vpop.permute.xlu0 %2031
        %2033 = vrot.lane.b32.xlu0 %v1995, 64
        %v2034 = vpop.permute.xlu0 %2033
        %2035 = vrot.lane.b32.xlu0 %v1996, 64
        %v2036 = vpop.permute.xlu0 %2035
        %2037 = vrot.lane.b32.xlu0 %v1997, 64
        %v2038 = vpop.permute.xlu0 %2037
        %2039 = vrot.lane.b32.xlu0 %v1998, 64
        %v2040 = vpop.permute.xlu0 %2039
        %2041 = vrot.lane.b32.xlu0 %v1999, 64
        %v2042 = vpop.permute.xlu0 %2041
        %2043 = vrot.lane.b32.xlu0 %v2000, 64
        %v2044 = vpop.permute.xlu0 %2043
        %2045 = vrot.lane.b32.xlu0 %v2001, 64
        %v2046 = vpop.permute.xlu0 %2045
        %2047 = vrot.lane.b32.xlu0 %v2002, 64
        %v2048 = vpop.permute.xlu0 %2047
        %2049 = vrot.lane.b32.xlu0 %v2003, 64
        %v2050 = vpop.permute.xlu0 %2049
        %2051 = vrot.lane.b32.xlu0 %v2004, 64
        %v2052 = vpop.permute.xlu0 %2051
        %v2069 = vsel %vm428, %v1895, %v2022
        %v2070 = vsel %vm428, %v1898, %v2024
        %v2071 = vsel %vm428, %v1903, %v2026
        %v2072 = vsel %vm428, %v1906, %v2028
        %v2073 = vsel %vm428, %v1911, %v2030
        %v2074 = vsel %vm428, %v1914, %v2032
        %v2075 = vsel %vm428, %v1919, %v2034
        %v2076 = vsel %vm428, %v1922, %v2036
        %v2077 = vsel %vm428, %v1927, %v2038
        %v2078 = vsel %vm428, %v1930, %v2040
        %v2079 = vsel %vm428, %v1935, %v2042
        %v2080 = vsel %vm428, %v1938, %v2044
        %v2081 = vsel %vm428, %v1943, %v2046
        %v2082 = vsel %vm428, %v1946, %v2048
        %v2083 = vsel %vm428, %v1951, %v2050
        %v2084 = vsel %vm428, %v1954, %v2052
        %2085 = vst [vmem:[%s322] sm:$0xff] %v2069
        %2086 = vst [vmem:[%s322 + $0x8] sm:$0xff] %v2070
        %2087 = vst [vmem:[%s322 + $0x10] sm:$0xff] %v2071
        %2088 = vst [vmem:[%s322 + $0x18] sm:$0xff] %v2072
        %2089 = vst [vmem:[%s322 + $0x20] sm:$0xff] %v2073
        %2090 = vst [vmem:[%s322 + $0x28] sm:$0xff] %v2074
        %2091 = vst [vmem:[%s322 + $0x30] sm:$0xff] %v2075
        %2092 = vst [vmem:[%s322 + $0x38] sm:$0xff] %v2076
        %2093 = vst [vmem:[%s322 + $0x40] sm:$0xff] %v2077
        %2094 = vst [vmem:[%s322 + $0x48] sm:$0xff] %v2078
        %2095 = vst [vmem:[%s322 + $0x50] sm:$0xff] %v2079
        %2096 = vst [vmem:[%s322 + $0x58] sm:$0xff] %v2080
        %2097 = vst [vmem:[%s322 + $0x60] sm:$0xff] %v2081
        %2098 = vst [vmem:[%s322 + $0x68] sm:$0xff] %v2082
        %2099 = vst [vmem:[%s322 + $0x70] sm:$0xff] %v2083
        %2100 = vst [vmem:[%s322 + $0x78] sm:$0xff] %v2084
        %s2101 = smul.u32 8, %s26
        %p2102 = scmp.lt.s32.totalorder %s25, 1
        %s2103 = scalar_select %p2102, %s25, 1
        %p2104 = scmp.lt.s32.totalorder %s2101, 15
        %s2105 = scalar_select %p2104, %s2101, 15
        %s2106 = smul.addr %s2105, 2
        %s2107 = smul.addr %s2103, 32
        %s2108 = sadd.s32 %s2106, %s2107
        %s2109 = smul.addr %s2108, 8
        %s2110 = scalar_lea.vmem %s7, %s2109
        // Predicated region
        $region53: #{model_forward.1} parent=47 // pred_check
          %p2111 = pneg %p205
        $region54: #{model_forward.1} parent=47 // pred_check_branch
          %2113 = sbr.rel (%p2111) target = $region56
        $region55: #{model_forward.1} parent=47 // pred_region
          %s2114 = smul.u32 8, %s26
        $region56: #{model_forward.1} parent=47 // pred_fallthru
          _
      $region48: #{model_forward.1} parent=5 // pred_fallthru
        _
      %p2115 = scmp.le.s32.totalorder 2, %s16
      // Predicated region
      $region57: #{model_forward.1} parent=5 // pred_check
        %p2116 = pneg %p2115
      $region58: #{model_forward.1} parent=5 // pred_check_branch
        %2118 = sbr.rel (%p2116) target = $region60
      $region59: #{model_forward.1} parent=5 // pred_region
        %s2119 = ssub.s32 %s16, 2
        // Predicated region
        $region61: #{model_forward.1} parent=59 // pred_check
          %p2120 = pneg %p211
        $region62: #{model_forward.1} parent=59 // pred_check_branch
          %2122 = sbr.rel (%p2120) target = $region64
        $region63: #{model_forward.1} parent=59 // pred_region
          %s2123 = smul.u32 8, %s28
          %p2124 = scmp.lt.s32.totalorder %s27, 1
          %s2125 = scalar_select %p2124, %s27, 1
          %p2126 = scmp.lt.s32.totalorder %s2123, 15
          %s2127 = scalar_select %p2126, %s2123, 15
          %s2128 = smul.addr %s2127, 2
          %s2129 = smul.addr %s2125, 32
          %s2130 = sadd.s32 %s2128, %s2129
          %s2131 = smul.addr %s2130, 8
          %s2132 = scalar_lea.vmem %s7, %s2131
        $region64: #{model_forward.1} parent=59 // pred_fallthru
          _
      $region60: #{model_forward.1} parent=5 // pred_fallthru
        _
    $region6: #{model_forward.1} parent=1 // loop_footer
      %s20 = sadd.s32 1, %s16
    $region7: #{model_forward.1} parent=1 // loop_footer_branch
      %15 = sbr.rel target = $region3
    $region8: #{model_forward.1} parent=1 // loop_exit
      _
    %2133 = vsyncpa [#allocation3], 1
    %s2134 = scalar_lea.sflag [#allocation3], 1
    %2135 = vsyncpa %s2134, 1

</llo_original>
